<compile_context>
chip_gen: v6e
topology: v6e:2x2x1
jax: 0.10.0
libtpu: 0.0.40
codegen_flags: <defaults>
</compile_context>

<pallas_src>
import functools

import jax
import jax.numpy as jnp
from jax.experimental import pallas as pl
from jax.experimental.pallas import tpu as pltpu


def gru_seq_kernel(gi_ref, whh_ref, bhn_ref, h_out_ref, h_ref, *, tc, hp):
    """One grid step = Tc GRU timesteps for one batch chunk.

    gi_ref : (Tc, Bc, 3*Hp)  precomputed x_t @ W_ih + (b_ih + [b_hr|b_hz|0]); gates r|z|n
    whh_ref: (Hp, 3*Hp)      recurrent weight (loop-invariant)
    bhn_ref: (1, Hp)         recurrent n-gate bias (must stay inside r * (.))
    h_out_ref: (Bc, Hp)      final hidden state (written on last time chunk)
    h_ref  : (Bc, Hp)        VMEM scratch, persists across the sequential time axis
    """
    t_blk = pl.program_id(1)

    @pl.when(t_blk == 0)
    def _():
        h_ref[...] = jnp.zeros_like(h_ref)

    whh = whh_ref[...]   # loaded once per grid step, reused for all Tc timesteps
    # Hoist the (1, Hp) -> (Bc, Hp) broadcast out of the unrolled loop.
    bhn = jnp.broadcast_to(bhn_ref[...], h_ref.shape)

    def step(i, h):
        gi = gi_ref[i]                                               # (Bc, 3Hp)
        gh = jnp.dot(h, whh, preferred_element_type=jnp.float32)     # (Bc, 3Hp)
        # 128-lane-aligned gate slabs -> slices are free views (no XLU shuffles).
        r = jax.nn.sigmoid(gi[:, 0:hp] + gh[:, 0:hp])
        z = jax.nn.sigmoid(gi[:, hp:2 * hp] + gh[:, hp:2 * hp])
        n = jnp.tanh(gi[:, 2 * hp:3 * hp] + r * (gh[:, 2 * hp:3 * hp] + bhn))
        return (1.0 - z) * n + z * h

    h_new = jax.lax.fori_loop(0, tc, step, h_ref[...], unroll=True)
    h_ref[...] = h_new

    @pl.when(t_blk == pl.num_programs(1) - 1)
    def _():
        h_out_ref[...] = h_new


def _round_up(x, m):
    return ((x + m - 1) // m) * m


def gru_model_forward(x_ids, embeddings, w_ih, w_hh, b_ih, b_hh, w_fc, b_fc,
                      time_block=8):
    """x_ids: (B, T) int32 token ids. Returns (B, output_size) float32.

    Weights stored as (in, 3H) so the kernel does x @ W (PyTorch weight_ih_l0.T),
    gate order (r, z, n).
    """
    B, T = x_ids.shape
    E = embeddings.shape[1]
    H = w_hh.shape[0]

    LANE, SUBLANE = 128, 8
    Hp = _round_up(H, LANE)     # lane-aligned gate width
    Bp = _round_up(B, SUBLANE)  # sublane-aligned batch

    def pad_gate_cols(w, rows_to=None):
        # (rows, 3H) -> pad each gate to Hp lanes -> (rows, 3*Hp); optionally pad rows.
        w3 = w.reshape(w.shape[0], 3, H)
        w3 = jnp.pad(w3, ((0, 0), (0, 0), (0, Hp - H)))
        w2 = w3.reshape(w.shape[0], 3 * Hp)
        if rows_to is not None and rows_to > w.shape[0]:
            w2 = jnp.pad(w2, ((0, rows_to - w.shape[0]), (0, 0)))
        return w2.astype(jnp.float32)

    w_ih_p = pad_gate_cols(w_ih)                 # (E, 3Hp)
    w_hh_p = pad_gate_cols(w_hh, rows_to=Hp)     # (Hp, 3Hp)
    b_ih_p = pad_gate_cols(b_ih)                 # (1, 3Hp)
    b_hh_p = pad_gate_cols(b_hh)                 # (1, 3Hp)

    # Fold the recurrent r/z biases into the hoisted input-side bias (plain adds for
    # those gates); only the n-gate recurrent bias stays in-kernel inside r * (.).
    gi_bias = b_ih_p + jnp.concatenate(
        [b_hh_p[:, :2 * Hp], jnp.zeros((1, Hp), jnp.float32)], axis=1)   # (1, 3Hp)
    b_hn_p = b_hh_p[:, 2 * Hp:]                                          # (1, Hp)

    # Embedding lookup directly in time-major order (no separate HBM transpose pass).
    x_tbe = jnp.take(embeddings.astype(jnp.float32), x_ids.T, axis=0)   # (T, B, E)

    # Hoisted input-side gate matmul: ONE big MXU-friendly matmul instead of T tiny ones.
    gi = (x_tbe.reshape(T * B, E) @ w_ih_p + gi_bias).reshape(T, B, 3 * Hp)
    gi = jnp.pad(gi, ((0, 0), (0, Bp - B), (0, 0)))                     # (T, Bp, 3Hp)

    # Time block size must divide T so every unrolled step is a real timestep.
    tc = max(1, min(time_block, T))
    while T % tc:
        tc -= 1
    nt = T // tc

    # Batch chunk (leading 'parallel' grid axis; shards across TCs when Bp is large).
    bc = min(Bp, 128)
    while Bp % bc:
        bc -= SUBLANE
    nb = Bp // bc

    kernel = functools.partial(gru_seq_kernel, tc=tc, hp=Hp)

    grid_spec = pltpu.PrefetchScalarGridSpec(
        num_scalar_prefetch=0,
        grid=(nb, nt),
        in_specs=[
            pl.BlockSpec((tc, bc, 3 * Hp), lambda b, t: (t, b, 0)),   # GI time slab
            pl.BlockSpec((Hp, 3 * Hp), lambda b, t: (0, 0)),          # W_hh (invariant)
            pl.BlockSpec((1, Hp), lambda b, t: (0, 0)),               # b_hn (invariant)
        ],
        out_specs=pl.BlockSpec((bc, Hp), lambda b, t: (b, 0)),        # final hidden state
        scratch_shapes=[pltpu.VMEM((bc, Hp), jnp.float32)],           # resident h
    )

    h_final = pl.pallas_call(
        kernel,
        out_shape=jax.ShapeDtypeStruct((Bp, Hp), jnp.float32),
        grid_spec=grid_spec,
        compiler_params=pltpu.CompilerParams(
            dimension_semantics=("parallel", "arbitrary"),
            vmem_limit_bytes=32 * 1024 * 1024),
    )(gi, w_hh_p, b_hn_p)

    # Final Linear on the last timestep's hidden state, once, in XLA (keeps W_fc/b_fc
    # out of VMEM during the recurrence; avoids O=4 masked partial stores in-kernel).
    return h_final[:B, :H] @ w_fc + b_fc


def gru_model_reference(x_ids, embeddings, w_ih, w_hh, b_ih, b_hh, w_fc, b_fc):
    """Pure-JAX reference matching torch.nn.GRU(batch_first=True) semantics."""
    embedded = jnp.take(embeddings, x_ids, axis=0)  # (B, T, E)
    B, T, E = embedded.shape
    H = w_hh.shape[0]
    h = jnp.zeros((B, H), jnp.float32)
    for t in range(T):
        x_t = embedded[:, t, :]
        gi = x_t @ w_ih + b_ih
        gh = h @ w_hh + b_hh
        i_r, i_z, i_n = gi[:, :H], gi[:, H:2 * H], gi[:, 2 * H:]
        h_r, h_z, h_n = gh[:, :H], gh[:, H:2 * H], gh[:, 2 * H:]
        r = jax.nn.sigmoid(i_r + h_r)
        z = jax.nn.sigmoid(i_z + h_z)
        n = jnp.tanh(i_n + r * h_n)
        h = (1.0 - z) * n + z * h
    return h @ w_fc + b_fc


if __name__ == "__main__":
    # Small deterministic config.
    vocab_size, embed_dim, hidden_dim, output_size = 50, 32, 32, 4
    batch, seq = 2, 8

    key = jax.random.PRNGKey(0)
    k_emb, k_ids, k_wih, k_whh, k_bih, k_bhh, k_wfc, k_bfc = jax.random.split(key, 8)

    embeddings = jax.random.normal(k_emb, (vocab_size, embed_dim), jnp.float32)
    x_ids = jax.random.randint(k_ids, (batch, seq), 0, vocab_size, jnp.int32)

    # GRU parameters stored as (in, 3H) == PyTorch weight_ih_l0 transposed; gates (r,z,n).
    scale = 0.1
    w_ih = scale * jax.random.normal(k_wih, (embed_dim, 3 * hidden_dim), jnp.float32)
    w_hh = scale * jax.random.normal(k_whh, (hidden_dim, 3 * hidden_dim), jnp.float32)
    b_ih = scale * jax.random.normal(k_bih, (1, 3 * hidden_dim), jnp.float32)
    b_hh = scale * jax.random.normal(k_bhh, (1, 3 * hidden_dim), jnp.float32)
    # Linear layer (H, O) + (1, O)
    w_fc = scale * jax.random.normal(k_wfc, (hidden_dim, output_size), jnp.float32)
    b_fc = scale * jax.random.normal(k_bfc, (1, output_size), jnp.float32)

    out = gru_model_forward(x_ids, embeddings, w_ih, w_hh, b_ih, b_hh, w_fc, b_fc)
    out = jax.block_until_ready(out)

    ref = gru_model_reference(x_ids, embeddings, w_ih, w_hh, b_ih, b_hh, w_fc, b_fc)
    assert out.shape == (batch, output_size)
    assert jnp.allclose(out, ref, atol=1e-3, rtol=1e-3), "mismatch vs reference"

    print("KERNEL_OK")
</pallas_src>

<mosaic_0001>
module attributes {stable_mosaic.version = 11 : i64} {
  func.func @gru_seq_kernel(%arg0: i32, %arg1: i32, %arg2: memref<8x8x384xf32, #tpu.memory_space<vmem>>, %arg3: memref<128x384xf32, #tpu.memory_space<vmem>>, %arg4: memref<1x128xf32, #tpu.memory_space<vmem>>, %arg5: memref<8x128xf32, #tpu.memory_space<vmem>>, %arg6: memref<8x128xf32, #tpu.memory_space<vmem>>) attributes {dimension_semantics = [#tpu.dimension_semantics<parallel>, #tpu.dimension_semantics<arbitrary>], iteration_bounds = array<i64: 1, 1>, scalar_prefetch = 0 : i64, scratch_operands = 1 : i64, tpu.core_type = #tpu.core_type<tc>, window_params = [{transform_indices = @transform_0, window_bounds = array<i64: 8, 8, 384>}, {pipeline_mode = #tpu.pipeline_mode<synchronous>, transform_indices = @transform_1, window_bounds = array<i64: 128, 384>}, {pipeline_mode = #tpu.pipeline_mode<synchronous>, transform_indices = @transform_2, window_bounds = array<i64: 1, 128>}, {transform_indices = @transform_3, window_bounds = array<i64: 8, 128>}]} {
    %c0_i32 = arith.constant 0 : i32
    %0 = arith.cmpi eq, %arg1, %c0_i32 : i32
    %1 = arith.extui %0 : i1 to i32
    %c0_i32_0 = arith.constant 0 : i32
    %2 = arith.cmpi ne, %1, %c0_i32_0 : i32
    scf.if %2 {
      %cst_58 = arith.constant 0.000000e+00 : f32
      %260 = vector.broadcast %cst_58 : f32 to vector<8x128xf32>
      %c0_59 = arith.constant 0 : index
      %c0_60 = arith.constant 0 : index
      %261 = vector.load %arg6[%c0_59, %c0_60] : memref<8x128xf32, #tpu.memory_space<vmem>>, vector<8x128xf32>
      tpu.vector_store %arg6[%c0_59, %c0_60], %260 {strides = array<i32>} : memref<8x128xf32, #tpu.memory_space<vmem>>, vector<8x128xf32>,
    } else {
    }
    %c0 = arith.constant 0 : index
    %c0_1 = arith.constant 0 : index
    %3 = vector.load %arg3[%c0, %c0_1] : memref<128x384xf32, #tpu.memory_space<vmem>>, vector<128x384xf32>
    %c0_2 = arith.constant 0 : index
    %c0_3 = arith.constant 0 : index
    %4 = vector.load %arg4[%c0_2, %c0_3] : memref<1x128xf32, #tpu.memory_space<vmem>>, vector<1x128xf32>
    %5 = vector.shape_cast %4 : vector<1x128xf32> to vector<1x128xf32>
    %6 = vector.broadcast %5 : vector<1x128xf32> to vector<8x128xf32>
    %c0_4 = arith.constant 0 : index
    %c0_5 = arith.constant 0 : index
    %7 = vector.load %arg6[%c0_4, %c0_5] : memref<8x128xf32, #tpu.memory_space<vmem>>, vector<8x128xf32>
    %c0_i32_6 = arith.constant 0 : i32
    %8 = arith.index_cast %c0_i32_6 : i32 to index
    %c0_7 = arith.constant 0 : index
    %c0_8 = arith.constant 0 : index
    %9 = vector.load %arg2[%8, %c0_7, %c0_8] : memref<8x8x384xf32, #tpu.memory_space<vmem>>, vector<1x8x384xf32>
    %10 = vector.shape_cast %9 : vector<1x8x384xf32> to vector<8x384xf32>
    %cst = arith.constant dense<0.000000e+00> : vector<8x384xf32>
    %11 = tpu.matmul %7, %3, %cst {dimension_numbers = #tpu.dot_dimension_numbers<[1], [0], [0], [1], [0, 0, 1, 1], [], []>} : vector<8x128xf32>, vector<128x384xf32>, vector<8x384xf32> -> vector<8x384xf32>
    %12 = vector.extract_strided_slice %10 {offsets = [0, 0], sizes = [8, 128], strides = [1, 1]} : vector<8x384xf32> to vector<8x128xf32>
    %13 = vector.extract_strided_slice %11 {offsets = [0, 0], sizes = [8, 128], strides = [1, 1]} : vector<8x384xf32> to vector<8x128xf32>
    %14 = arith.addf %12, %13 : vector<8x128xf32>
    %15 = arith.negf %14 : vector<8x128xf32>
    %16 = math.exp %15 : vector<8x128xf32>
    %cst_9 = arith.constant 1.000000e+00 : f32
    %17 = vector.broadcast %cst_9 : f32 to vector<8x128xf32>
    %18 = arith.addf %17, %16 : vector<8x128xf32>
    %19 = arith.divf %17, %18 : vector<8x128xf32>
    %20 = vector.extract_strided_slice %10 {offsets = [0, 128], sizes = [8, 128], strides = [1, 1]} : vector<8x384xf32> to vector<8x128xf32>
    %21 = vector.extract_strided_slice %11 {offsets = [0, 128], sizes = [8, 128], strides = [1, 1]} : vector<8x384xf32> to vector<8x128xf32>
    %22 = arith.addf %20, %21 : vector<8x128xf32>
    %23 = arith.negf %22 : vector<8x128xf32>
    %24 = math.exp %23 : vector<8x128xf32>
    %cst_10 = arith.constant 1.000000e+00 : f32
    %25 = vector.broadcast %cst_10 : f32 to vector<8x128xf32>
    %26 = arith.addf %25, %24 : vector<8x128xf32>
    %27 = arith.divf %25, %26 : vector<8x128xf32>
    %28 = vector.extract_strided_slice %10 {offsets = [0, 256], sizes = [8, 128], strides = [1, 1]} : vector<8x384xf32> to vector<8x128xf32>
    %29 = vector.extract_strided_slice %11 {offsets = [0, 256], sizes = [8, 128], strides = [1, 1]} : vector<8x384xf32> to vector<8x128xf32>
    %30 = arith.addf %29, %6 : vector<8x128xf32>
    %31 = arith.mulf %19, %30 : vector<8x128xf32>
    %32 = arith.addf %28, %31 : vector<8x128xf32>
    %33 = math.tanh %32 : vector<8x128xf32>
    %cst_11 = arith.constant 1.000000e+00 : f32
    %34 = vector.broadcast %cst_11 : f32 to vector<8x128xf32>
    %35 = arith.subf %34, %27 : vector<8x128xf32>
    %36 = arith.mulf %35, %33 : vector<8x128xf32>
    %37 = arith.mulf %27, %7 : vector<8x128xf32>
    %38 = arith.addf %36, %37 : vector<8x128xf32>
    %c1_i32 = arith.constant 1 : i32
    %39 = arith.index_cast %c1_i32 : i32 to index
    %c0_12 = arith.constant 0 : index
    %c0_13 = arith.constant 0 : index
    %40 = vector.load %arg2[%39, %c0_12, %c0_13] : memref<8x8x384xf32, #tpu.memory_space<vmem>>, vector<1x8x384xf32>
    %41 = vector.shape_cast %40 : vector<1x8x384xf32> to vector<8x384xf32>
    %cst_14 = arith.constant dense<0.000000e+00> : vector<8x384xf32>
    %42 = tpu.matmul %38, %3, %cst_14 {dimension_numbers = #tpu.dot_dimension_numbers<[1], [0], [0], [1], [0, 0, 1, 1], [], []>} : vector<8x128xf32>, vector<128x384xf32>, vector<8x384xf32> -> vector<8x384xf32>
    %43 = vector.extract_strided_slice %41 {offsets = [0, 0], sizes = [8, 128], strides = [1, 1]} : vector<8x384xf32> to vector<8x128xf32>
    %44 = vector.extract_strided_slice %42 {offsets = [0, 0], sizes = [8, 128], strides = [1, 1]} : vector<8x384xf32> to vector<8x128xf32>
    %45 = arith.addf %43, %44 : vector<8x128xf32>
    %46 = arith.negf %45 : vector<8x128xf32>
    %47 = math.exp %46 : vector<8x128xf32>
    %cst_15 = arith.constant 1.000000e+00 : f32
    %48 = vector.broadcast %cst_15 : f32 to vector<8x128xf32>
    %49 = arith.addf %48, %47 : vector<8x128xf32>
    %50 = arith.divf %48, %49 : vector<8x128xf32>
    %51 = vector.extract_strided_slice %41 {offsets = [0, 128], sizes = [8, 128], strides = [1, 1]} : vector<8x384xf32> to vector<8x128xf32>
    %52 = vector.extract_strided_slice %42 {offsets = [0, 128], sizes = [8, 128], strides = [1, 1]} : vector<8x384xf32> to vector<8x128xf32>
    %53 = arith.addf %51, %52 : vector<8x128xf32>
    %54 = arith.negf %53 : vector<8x128xf32>
    %55 = math.exp %54 : vector<8x128xf32>
    %cst_16 = arith.constant 1.000000e+00 : f32
    %56 = vector.broadcast %cst_16 : f32 to vector<8x128xf32>
    %57 = arith.addf %56, %55 : vector<8x128xf32>
    %58 = arith.divf %56, %57 : vector<8x128xf32>
    %59 = vector.extract_strided_slice %41 {offsets = [0, 256], sizes = [8, 128], strides = [1, 1]} : vector<8x384xf32> to vector<8x128xf32>
    %60 = vector.extract_strided_slice %42 {offsets = [0, 256], sizes = [8, 128], strides = [1, 1]} : vector<8x384xf32> to vector<8x128xf32>
    %61 = arith.addf %60, %6 : vector<8x128xf32>
    %62 = arith.mulf %50, %61 : vector<8x128xf32>
    %63 = arith.addf %59, %62 : vector<8x128xf32>
    %64 = math.tanh %63 : vector<8x128xf32>
    %cst_17 = arith.constant 1.000000e+00 : f32
    %65 = vector.broadcast %cst_17 : f32 to vector<8x128xf32>
    %66 = arith.subf %65, %58 : vector<8x128xf32>
    %67 = arith.mulf %66, %64 : vector<8x128xf32>
    %68 = arith.mulf %58, %38 : vector<8x128xf32>
    %69 = arith.addf %67, %68 : vector<8x128xf32>
    %c2_i32 = arith.constant 2 : i32
    %70 = arith.index_cast %c2_i32 : i32 to index
    %c0_18 = arith.constant 0 : index
    %c0_19 = arith.constant 0 : index
    %71 = vector.load %arg2[%70, %c0_18, %c0_19] : memref<8x8x384xf32, #tpu.memory_space<vmem>>, vector<1x8x384xf32>
    %72 = vector.shape_cast %71 : vector<1x8x384xf32> to vector<8x384xf32>
    %cst_20 = arith.constant dense<0.000000e+00> : vector<8x384xf32>
    %73 = tpu.matmul %69, %3, %cst_20 {dimension_numbers = #tpu.dot_dimension_numbers<[1], [0], [0], [1], [0, 0, 1, 1], [], []>} : vector<8x128xf32>, vector<128x384xf32>, vector<8x384xf32> -> vector<8x384xf32>
    %74 = vector.extract_strided_slice %72 {offsets = [0, 0], sizes = [8, 128], strides = [1, 1]} : vector<8x384xf32> to vector<8x128xf32>
    %75 = vector.extract_strided_slice %73 {offsets = [0, 0], sizes = [8, 128], strides = [1, 1]} : vector<8x384xf32> to vector<8x128xf32>
    %76 = arith.addf %74, %75 : vector<8x128xf32>
    %77 = arith.negf %76 : vector<8x128xf32>
    %78 = math.exp %77 : vector<8x128xf32>
    %cst_21 = arith.constant 1.000000e+00 : f32
    %79 = vector.broadcast %cst_21 : f32 to vector<8x128xf32>
    %80 = arith.addf %79, %78 : vector<8x128xf32>
    %81 = arith.divf %79, %80 : vector<8x128xf32>
    %82 = vector.extract_strided_slice %72 {offsets = [0, 128], sizes = [8, 128], strides = [1, 1]} : vector<8x384xf32> to vector<8x128xf32>
    %83 = vector.extract_strided_slice %73 {offsets = [0, 128], sizes = [8, 128], strides = [1, 1]} : vector<8x384xf32> to vector<8x128xf32>
    %84 = arith.addf %82, %83 : vector<8x128xf32>
    %85 = arith.negf %84 : vector<8x128xf32>
    %86 = math.exp %85 : vector<8x128xf32>
    %cst_22 = arith.constant 1.000000e+00 : f32
    %87 = vector.broadcast %cst_22 : f32 to vector<8x128xf32>
    %88 = arith.addf %87, %86 : vector<8x128xf32>
    %89 = arith.divf %87, %88 : vector<8x128xf32>
    %90 = vector.extract_strided_slice %72 {offsets = [0, 256], sizes = [8, 128], strides = [1, 1]} : vector<8x384xf32> to vector<8x128xf32>
    %91 = vector.extract_strided_slice %73 {offsets = [0, 256], sizes = [8, 128], strides = [1, 1]} : vector<8x384xf32> to vector<8x128xf32>
    %92 = arith.addf %91, %6 : vector<8x128xf32>
    %93 = arith.mulf %81, %92 : vector<8x128xf32>
    %94 = arith.addf %90, %93 : vector<8x128xf32>
    %95 = math.tanh %94 : vector<8x128xf32>
    %cst_23 = arith.constant 1.000000e+00 : f32
    %96 = vector.broadcast %cst_23 : f32 to vector<8x128xf32>
    %97 = arith.subf %96, %89 : vector<8x128xf32>
    %98 = arith.mulf %97, %95 : vector<8x128xf32>
    %99 = arith.mulf %89, %69 : vector<8x128xf32>
    %100 = arith.addf %98, %99 : vector<8x128xf32>
    %c3_i32 = arith.constant 3 : i32
    %101 = arith.index_cast %c3_i32 : i32 to index
    %c0_24 = arith.constant 0 : index
    %c0_25 = arith.constant 0 : index
    %102 = vector.load %arg2[%101, %c0_24, %c0_25] : memref<8x8x384xf32, #tpu.memory_space<vmem>>, vector<1x8x384xf32>
    %103 = vector.shape_cast %102 : vector<1x8x384xf32> to vector<8x384xf32>
    %cst_26 = arith.constant dense<0.000000e+00> : vector<8x384xf32>
    %104 = tpu.matmul %100, %3, %cst_26 {dimension_numbers = #tpu.dot_dimension_numbers<[1], [0], [0], [1], [0, 0, 1, 1], [], []>} : vector<8x128xf32>, vector<128x384xf32>, vector<8x384xf32> -> vector<8x384xf32>
    %105 = vector.extract_strided_slice %103 {offsets = [0, 0], sizes = [8, 128], strides = [1, 1]} : vector<8x384xf32> to vector<8x128xf32>
    %106 = vector.extract_strided_slice %104 {offsets = [0, 0], sizes = [8, 128], strides = [1, 1]} : vector<8x384xf32> to vector<8x128xf32>
    %107 = arith.addf %105, %106 : vector<8x128xf32>
    %108 = arith.negf %107 : vector<8x128xf32>
    %109 = math.exp %108 : vector<8x128xf32>
    %cst_27 = arith.constant 1.000000e+00 : f32
    %110 = vector.broadcast %cst_27 : f32 to vector<8x128xf32>
    %111 = arith.addf %110, %109 : vector<8x128xf32>
    %112 = arith.divf %110, %111 : vector<8x128xf32>
    %113 = vector.extract_strided_slice %103 {offsets = [0, 128], sizes = [8, 128], strides = [1, 1]} : vector<8x384xf32> to vector<8x128xf32>
    %114 = vector.extract_strided_slice %104 {offsets = [0, 128], sizes = [8, 128], strides = [1, 1]} : vector<8x384xf32> to vector<8x128xf32>
    %115 = arith.addf %113, %114 : vector<8x128xf32>
    %116 = arith.negf %115 : vector<8x128xf32>
    %117 = math.exp %116 : vector<8x128xf32>
    %cst_28 = arith.constant 1.000000e+00 : f32
    %118 = vector.broadcast %cst_28 : f32 to vector<8x128xf32>
    %119 = arith.addf %118, %117 : vector<8x128xf32>
    %120 = arith.divf %118, %119 : vector<8x128xf32>
    %121 = vector.extract_strided_slice %103 {offsets = [0, 256], sizes = [8, 128], strides = [1, 1]} : vector<8x384xf32> to vector<8x128xf32>
    %122 = vector.extract_strided_slice %104 {offsets = [0, 256], sizes = [8, 128], strides = [1, 1]} : vector<8x384xf32> to vector<8x128xf32>
    %123 = arith.addf %122, %6 : vector<8x128xf32>
    %124 = arith.mulf %112, %123 : vector<8x128xf32>
    %125 = arith.addf %121, %124 : vector<8x128xf32>
    %126 = math.tanh %125 : vector<8x128xf32>
    %cst_29 = arith.constant 1.000000e+00 : f32
    %127 = vector.broadcast %cst_29 : f32 to vector<8x128xf32>
    %128 = arith.subf %127, %120 : vector<8x128xf32>
    %129 = arith.mulf %128, %126 : vector<8x128xf32>
    %130 = arith.mulf %120, %100 : vector<8x128xf32>
    %131 = arith.addf %129, %130 : vector<8x128xf32>
    %c4_i32 = arith.constant 4 : i32
    %132 = arith.index_cast %c4_i32 : i32 to index
    %c0_30 = arith.constant 0 : index
    %c0_31 = arith.constant 0 : index
    %133 = vector.load %arg2[%132, %c0_30, %c0_31] : memref<8x8x384xf32, #tpu.memory_space<vmem>>, vector<1x8x384xf32>
    %134 = vector.shape_cast %133 : vector<1x8x384xf32> to vector<8x384xf32>
    %cst_32 = arith.constant dense<0.000000e+00> : vector<8x384xf32>
    %135 = tpu.matmul %131, %3, %cst_32 {dimension_numbers = #tpu.dot_dimension_numbers<[1], [0], [0], [1], [0, 0, 1, 1], [], []>} : vector<8x128xf32>, vector<128x384xf32>, vector<8x384xf32> -> vector<8x384xf32>
    %136 = vector.extract_strided_slice %134 {offsets = [0, 0], sizes = [8, 128], strides = [1, 1]} : vector<8x384xf32> to vector<8x128xf32>
    %137 = vector.extract_strided_slice %135 {offsets = [0, 0], sizes = [8, 128], strides = [1, 1]} : vector<8x384xf32> to vector<8x128xf32>
    %138 = arith.addf %136, %137 : vector<8x128xf32>
    %139 = arith.negf %138 : vector<8x128xf32>
    %140 = math.exp %139 : vector<8x128xf32>
    %cst_33 = arith.constant 1.000000e+00 : f32
    %141 = vector.broadcast %cst_33 : f32 to vector<8x128xf32>
    %142 = arith.addf %141, %140 : vector<8x128xf32>
    %143 = arith.divf %141, %142 : vector<8x128xf32>
    %144 = vector.extract_strided_slice %134 {offsets = [0, 128], sizes = [8, 128], strides = [1, 1]} : vector<8x384xf32> to vector<8x128xf32>
    %145 = vector.extract_strided_slice %135 {offsets = [0, 128], sizes = [8, 128], strides = [1, 1]} : vector<8x384xf32> to vector<8x128xf32>
    %146 = arith.addf %144, %145 : vector<8x128xf32>
    %147 = arith.negf %146 : vector<8x128xf32>
    %148 = math.exp %147 : vector<8x128xf32>
    %cst_34 = arith.constant 1.000000e+00 : f32
    %149 = vector.broadcast %cst_34 : f32 to vector<8x128xf32>
    %150 = arith.addf %149, %148 : vector<8x128xf32>
    %151 = arith.divf %149, %150 : vector<8x128xf32>
    %152 = vector.extract_strided_slice %134 {offsets = [0, 256], sizes = [8, 128], strides = [1, 1]} : vector<8x384xf32> to vector<8x128xf32>
    %153 = vector.extract_strided_slice %135 {offsets = [0, 256], sizes = [8, 128], strides = [1, 1]} : vector<8x384xf32> to vector<8x128xf32>
    %154 = arith.addf %153, %6 : vector<8x128xf32>
    %155 = arith.mulf %143, %154 : vector<8x128xf32>
    %156 = arith.addf %152, %155 : vector<8x128xf32>
    %157 = math.tanh %156 : vector<8x128xf32>
    %cst_35 = arith.constant 1.000000e+00 : f32
    %158 = vector.broadcast %cst_35 : f32 to vector<8x128xf32>
    %159 = arith.subf %158, %151 : vector<8x128xf32>
    %160 = arith.mulf %159, %157 : vector<8x128xf32>
    %161 = arith.mulf %151, %131 : vector<8x128xf32>
    %162 = arith.addf %160, %161 : vector<8x128xf32>
    %c5_i32 = arith.constant 5 : i32
    %163 = arith.index_cast %c5_i32 : i32 to index
    %c0_36 = arith.constant 0 : index
    %c0_37 = arith.constant 0 : index
    %164 = vector.load %arg2[%163, %c0_36, %c0_37] : memref<8x8x384xf32, #tpu.memory_space<vmem>>, vector<1x8x384xf32>
    %165 = vector.shape_cast %164 : vector<1x8x384xf32> to vector<8x384xf32>
    %cst_38 = arith.constant dense<0.000000e+00> : vector<8x384xf32>
    %166 = tpu.matmul %162, %3, %cst_38 {dimension_numbers = #tpu.dot_dimension_numbers<[1], [0], [0], [1], [0, 0, 1, 1], [], []>} : vector<8x128xf32>, vector<128x384xf32>, vector<8x384xf32> -> vector<8x384xf32>
    %167 = vector.extract_strided_slice %165 {offsets = [0, 0], sizes = [8, 128], strides = [1, 1]} : vector<8x384xf32> to vector<8x128xf32>
    %168 = vector.extract_strided_slice %166 {offsets = [0, 0], sizes = [8, 128], strides = [1, 1]} : vector<8x384xf32> to vector<8x128xf32>
    %169 = arith.addf %167, %168 : vector<8x128xf32>
    %170 = arith.negf %169 : vector<8x128xf32>
    %171 = math.exp %170 : vector<8x128xf32>
    %cst_39 = arith.constant 1.000000e+00 : f32
    %172 = vector.broadcast %cst_39 : f32 to vector<8x128xf32>
    %173 = arith.addf %172, %171 : vector<8x128xf32>
    %174 = arith.divf %172, %173 : vector<8x128xf32>
    %175 = vector.extract_strided_slice %165 {offsets = [0, 128], sizes = [8, 128], strides = [1, 1]} : vector<8x384xf32> to vector<8x128xf32>
    %176 = vector.extract_strided_slice %166 {offsets = [0, 128], sizes = [8, 128], strides = [1, 1]} : vector<8x384xf32> to vector<8x128xf32>
    %177 = arith.addf %175, %176 : vector<8x128xf32>
    %178 = arith.negf %177 : vector<8x128xf32>
    %179 = math.exp %178 : vector<8x128xf32>
    %cst_40 = arith.constant 1.000000e+00 : f32
    %180 = vector.broadcast %cst_40 : f32 to vector<8x128xf32>
    %181 = arith.addf %180, %179 : vector<8x128xf32>
    %182 = arith.divf %180, %181 : vector<8x128xf32>
    %183 = vector.extract_strided_slice %165 {offsets = [0, 256], sizes = [8, 128], strides = [1, 1]} : vector<8x384xf32> to vector<8x128xf32>
    %184 = vector.extract_strided_slice %166 {offsets = [0, 256], sizes = [8, 128], strides = [1, 1]} : vector<8x384xf32> to vector<8x128xf32>
    %185 = arith.addf %184, %6 : vector<8x128xf32>
    %186 = arith.mulf %174, %185 : vector<8x128xf32>
    %187 = arith.addf %183, %186 : vector<8x128xf32>
    %188 = math.tanh %187 : vector<8x128xf32>
    %cst_41 = arith.constant 1.000000e+00 : f32
    %189 = vector.broadcast %cst_41 : f32 to vector<8x128xf32>
    %190 = arith.subf %189, %182 : vector<8x128xf32>
    %191 = arith.mulf %190, %188 : vector<8x128xf32>
    %192 = arith.mulf %182, %162 : vector<8x128xf32>
    %193 = arith.addf %191, %192 : vector<8x128xf32>
    %c6_i32 = arith.constant 6 : i32
    %194 = arith.index_cast %c6_i32 : i32 to index
    %c0_42 = arith.constant 0 : index
    %c0_43 = arith.constant 0 : index
    %195 = vector.load %arg2[%194, %c0_42, %c0_43] : memref<8x8x384xf32, #tpu.memory_space<vmem>>, vector<1x8x384xf32>
    %196 = vector.shape_cast %195 : vector<1x8x384xf32> to vector<8x384xf32>
    %cst_44 = arith.constant dense<0.000000e+00> : vector<8x384xf32>
    %197 = tpu.matmul %193, %3, %cst_44 {dimension_numbers = #tpu.dot_dimension_numbers<[1], [0], [0], [1], [0, 0, 1, 1], [], []>} : vector<8x128xf32>, vector<128x384xf32>, vector<8x384xf32> -> vector<8x384xf32>
    %198 = vector.extract_strided_slice %196 {offsets = [0, 0], sizes = [8, 128], strides = [1, 1]} : vector<8x384xf32> to vector<8x128xf32>
    %199 = vector.extract_strided_slice %197 {offsets = [0, 0], sizes = [8, 128], strides = [1, 1]} : vector<8x384xf32> to vector<8x128xf32>
    %200 = arith.addf %198, %199 : vector<8x128xf32>
    %201 = arith.negf %200 : vector<8x128xf32>
    %202 = math.exp %201 : vector<8x128xf32>
    %cst_45 = arith.constant 1.000000e+00 : f32
    %203 = vector.broadcast %cst_45 : f32 to vector<8x128xf32>
    %204 = arith.addf %203, %202 : vector<8x128xf32>
    %205 = arith.divf %203, %204 : vector<8x128xf32>
    %206 = vector.extract_strided_slice %196 {offsets = [0, 128], sizes = [8, 128], strides = [1, 1]} : vector<8x384xf32> to vector<8x128xf32>
    %207 = vector.extract_strided_slice %197 {offsets = [0, 128], sizes = [8, 128], strides = [1, 1]} : vector<8x384xf32> to vector<8x128xf32>
    %208 = arith.addf %206, %207 : vector<8x128xf32>
    %209 = arith.negf %208 : vector<8x128xf32>
    %210 = math.exp %209 : vector<8x128xf32>
    %cst_46 = arith.constant 1.000000e+00 : f32
    %211 = vector.broadcast %cst_46 : f32 to vector<8x128xf32>
    %212 = arith.addf %211, %210 : vector<8x128xf32>
    %213 = arith.divf %211, %212 : vector<8x128xf32>
    %214 = vector.extract_strided_slice %196 {offsets = [0, 256], sizes = [8, 128], strides = [1, 1]} : vector<8x384xf32> to vector<8x128xf32>
    %215 = vector.extract_strided_slice %197 {offsets = [0, 256], sizes = [8, 128], strides = [1, 1]} : vector<8x384xf32> to vector<8x128xf32>
    %216 = arith.addf %215, %6 : vector<8x128xf32>
    %217 = arith.mulf %205, %216 : vector<8x128xf32>
    %218 = arith.addf %214, %217 : vector<8x128xf32>
    %219 = math.tanh %218 : vector<8x128xf32>
    %cst_47 = arith.constant 1.000000e+00 : f32
    %220 = vector.broadcast %cst_47 : f32 to vector<8x128xf32>
    %221 = arith.subf %220, %213 : vector<8x128xf32>
    %222 = arith.mulf %221, %219 : vector<8x128xf32>
    %223 = arith.mulf %213, %193 : vector<8x128xf32>
    %224 = arith.addf %222, %223 : vector<8x128xf32>
    %c7_i32 = arith.constant 7 : i32
    %225 = arith.index_cast %c7_i32 : i32 to index
    %c0_48 = arith.constant 0 : index
    %c0_49 = arith.constant 0 : index
    %226 = vector.load %arg2[%225, %c0_48, %c0_49] : memref<8x8x384xf32, #tpu.memory_space<vmem>>, vector<1x8x384xf32>
    %227 = vector.shape_cast %226 : vector<1x8x384xf32> to vector<8x384xf32>
    %cst_50 = arith.constant dense<0.000000e+00> : vector<8x384xf32>
    %228 = tpu.matmul %224, %3, %cst_50 {dimension_numbers = #tpu.dot_dimension_numbers<[1], [0], [0], [1], [0, 0, 1, 1], [], []>} : vector<8x128xf32>, vector<128x384xf32>, vector<8x384xf32> -> vector<8x384xf32>
    %229 = vector.extract_strided_slice %227 {offsets = [0, 0], sizes = [8, 128], strides = [1, 1]} : vector<8x384xf32> to vector<8x128xf32>
    %230 = vector.extract_strided_slice %228 {offsets = [0, 0], sizes = [8, 128], strides = [1, 1]} : vector<8x384xf32> to vector<8x128xf32>
    %231 = arith.addf %229, %230 : vector<8x128xf32>
    %232 = arith.negf %231 : vector<8x128xf32>
    %233 = math.exp %232 : vector<8x128xf32>
    %cst_51 = arith.constant 1.000000e+00 : f32
    %234 = vector.broadcast %cst_51 : f32 to vector<8x128xf32>
    %235 = arith.addf %234, %233 : vector<8x128xf32>
    %236 = arith.divf %234, %235 : vector<8x128xf32>
    %237 = vector.extract_strided_slice %227 {offsets = [0, 128], sizes = [8, 128], strides = [1, 1]} : vector<8x384xf32> to vector<8x128xf32>
    %238 = vector.extract_strided_slice %228 {offsets = [0, 128], sizes = [8, 128], strides = [1, 1]} : vector<8x384xf32> to vector<8x128xf32>
    %239 = arith.addf %237, %238 : vector<8x128xf32>
    %240 = arith.negf %239 : vector<8x128xf32>
    %241 = math.exp %240 : vector<8x128xf32>
    %cst_52 = arith.constant 1.000000e+00 : f32
    %242 = vector.broadcast %cst_52 : f32 to vector<8x128xf32>
    %243 = arith.addf %242, %241 : vector<8x128xf32>
    %244 = arith.divf %242, %243 : vector<8x128xf32>
    %245 = vector.extract_strided_slice %227 {offsets = [0, 256], sizes = [8, 128], strides = [1, 1]} : vector<8x384xf32> to vector<8x128xf32>
    %246 = vector.extract_strided_slice %228 {offsets = [0, 256], sizes = [8, 128], strides = [1, 1]} : vector<8x384xf32> to vector<8x128xf32>
    %247 = arith.addf %246, %6 : vector<8x128xf32>
    %248 = arith.mulf %236, %247 : vector<8x128xf32>
    %249 = arith.addf %245, %248 : vector<8x128xf32>
    %250 = math.tanh %249 : vector<8x128xf32>
    %cst_53 = arith.constant 1.000000e+00 : f32
    %251 = vector.broadcast %cst_53 : f32 to vector<8x128xf32>
    %252 = arith.subf %251, %244 : vector<8x128xf32>
    %253 = arith.mulf %252, %250 : vector<8x128xf32>
    %254 = arith.mulf %244, %224 : vector<8x128xf32>
    %255 = arith.addf %253, %254 : vector<8x128xf32>
    %c8_i32 = arith.constant 8 : i32
    %c0_54 = arith.constant 0 : index
    %c0_55 = arith.constant 0 : index
    %256 = vector.load %arg6[%c0_54, %c0_55] : memref<8x128xf32, #tpu.memory_space<vmem>>, vector<8x128xf32>
    tpu.vector_store %arg6[%c0_54, %c0_55], %255 {strides = array<i32>} : memref<8x128xf32, #tpu.memory_space<vmem>>, vector<8x128xf32>,
    %c0_i32_56 = arith.constant 0 : i32
    %257 = arith.cmpi eq, %arg1, %c0_i32_56 : i32
    %258 = arith.extui %257 : i1 to i32
    %c0_i32_57 = arith.constant 0 : i32
    %259 = arith.cmpi ne, %258, %c0_i32_57 : i32
    scf.if %259 {
      %c0_58 = arith.constant 0 : index
      %c0_59 = arith.constant 0 : index
      %260 = vector.load %arg5[%c0_58, %c0_59] : memref<8x128xf32, #tpu.memory_space<vmem>>, vector<8x128xf32>
      tpu.vector_store %arg5[%c0_58, %c0_59], %255 {strides = array<i32>} : memref<8x128xf32, #tpu.memory_space<vmem>>, vector<8x128xf32>,
    } else {
    }
    return
  }
  func.func @transform_0(%arg0: i32, %arg1: i32) -> (i32, i32, i32) {
    %c0_i32 = arith.constant 0 : i32
    %c0_i32_0 = arith.constant 0 : i32
    return %arg1, %arg0, %c0_i32 : i32, i32, i32
  }
  func.func @transform_1(%arg0: i32, %arg1: i32) -> (i32, i32) {
    %c0_i32 = arith.constant 0 : i32
    %c0_i32_0 = arith.constant 0 : i32
    %c0_i32_1 = arith.constant 0 : i32
    return %c0_i32, %c0_i32_0 : i32, i32
  }
  func.func @transform_2(%arg0: i32, %arg1: i32) -> (i32, i32) {
    %c0_i32 = arith.constant 0 : i32
    %c0_i32_0 = arith.constant 0 : i32
    %c0_i32_1 = arith.constant 0 : i32
    return %c0_i32, %c0_i32_0 : i32, i32
  }
  func.func @transform_3(%arg0: i32, %arg1: i32) -> (i32, i32) {
    %c0_i32 = arith.constant 0 : i32
    %c0_i32_0 = arith.constant 0 : i32
    return %arg0, %c0_i32 : i32, i32
  }
}

</mosaic_0001>

<llo_original>
// kernel: tpu_custom_call.1
$region0: #{tpu_custom_call.1}
  #allocation0 [shape = 'u32[]', space=smem, size = 0x4, offset = 0x4, fixed_abs, tag = 'smem constant byte address 0x4 - core index']
  #allocation1 [shape = 'u32[144,128]{1,0:T(1,128)}', space=vmem, size = 0x12000, scoped, tag = 'internal scratch']
  #allocation2 [shape = 'f32[8,128]{1,0:T(8,128)}', space=vmem, size = 0x1000, scoped, tag = 'scratch operand']
  %s0 = inlined_call_operand.hbm [shape: f32[8,8,384], index: 0, kind: input, shape index: {}]
  %s1 = inlined_call_operand.hbm [shape: f32[128,384], index: 1, kind: input, shape index: {}]
  %s2 = inlined_call_operand.vmem [shape: f32[1,128], index: 2, kind: input, shape index: {}]
  %s3 = inlined_call_operand.hbm [shape: f32[8,128], index: 3, kind: output, shape index: {}]
  %s4 = sld [smem:[#allocation0]]
  $region38: #{tpu_custom_call.1} parent=0
    _
  %s6 = ssub.s32 1, %s4
  %s7 = scalar_select 0, %s6, %s4
  $region1: #{tpu_custom_call.1} parent=0
    #allocation3 [shape = 'u8[98304]{0}', space=vmem, size = 0x18000, scoped, tag = 'input window, operand 0, single buffered']
    #allocation4 [shape = 's32[1]{0}', space=sflag, size = 0x4, scoped, tag = 'scoped memory for tpu_custom_call.1']
    #allocation5 [shape = 's32[1]{0}', space=sflag, size = 0x4, scoped, tag = 'scoped memory for tpu_custom_call.1']
    #allocation6 [shape = 'u8[196608]{0}', space=vmem, size = 0x30000, scoped, tag = 'input window, operand 1, single buffered']
    #allocation7 [shape = 's32[1]{0}', space=sflag, size = 0x4, scoped, tag = 'scoped memory for tpu_custom_call.1']
    #allocation8 [shape = 'u8[4096]{0}', space=vmem, size = 0x1000, scoped, tag = 'output window, operand 0, single buffered']
    %8 = vsyncpa [#allocation4], 0
    %9 = vsyncpa [#allocation7], 0
    %10 = vsyncpa [#allocation5], 0
    // Predicated region
    $region2: #{tpu_custom_call.1} parent=1 // pred_check
      _
    $region3: #{tpu_custom_call.1} parent=1 // pred_check_branch
      %12 = sbr.rel (0) target = $region5
    $region4: #{tpu_custom_call.1} parent=1 // pred_region
      %s14 = ssub.s32 3072, 3072
      %15 = vsyncadd [#allocation4], %s14
      %s16 = sshll.u32 [#allocation3], 4
      %s17 = int_to_ptr.vmem [resolvable:$true] %s16
      %22 = dma.hbm_to_vmem [thread:$0]  %s0, 3072, %s17, [#allocation4], 384, 384, 24
    $region5: #{tpu_custom_call.1} parent=1 // pred_fallthru
      _
    // Predicated region
    $region6: #{tpu_custom_call.1} parent=1 // pred_check
      _
    $region7: #{tpu_custom_call.1} parent=1 // pred_check_branch
      %24 = sbr.rel (0) target = $region9
    $region8: #{tpu_custom_call.1} parent=1 // pred_region
      %s26 = ssub.s32 6144, 6144
      %27 = vsyncadd [#allocation7], %s26
      %s28 = sshll.u32 [#allocation6], 4
      %s29 = int_to_ptr.vmem [resolvable:$true] %s28
      %34 = dma.hbm_to_vmem [thread:$0]  %s1, 6144, %s29, [#allocation7], 384, 384, 24
    $region9: #{tpu_custom_call.1} parent=1 // pred_fallthru
      _
    // Predicated region
    $region10: #{tpu_custom_call.1} parent=1 // pred_check
      _
    $region11: #{tpu_custom_call.1} parent=1 // pred_check_branch
      %36 = sbr.rel (0) target = $region13
    $region12: #{tpu_custom_call.1} parent=1 // pred_region
      _
    $region13: #{tpu_custom_call.1} parent=1 // pred_fallthru
      _
    // Predicated region
    $region14: #{tpu_custom_call.1} parent=1 // pred_check
      _
    $region15: #{tpu_custom_call.1} parent=1 // pred_check_branch
      %38 = sbr.rel (0) target = $region17
    $region16: #{tpu_custom_call.1} parent=1 // pred_region
      %39 = dma.done [#allocation4], 3072
    $region17: #{tpu_custom_call.1} parent=1 // pred_fallthru
      _
    // Predicated region
    $region18: #{tpu_custom_call.1} parent=1 // pred_check
      _
    $region19: #{tpu_custom_call.1} parent=1 // pred_check_branch
      %41 = sbr.rel (0) target = $region21
    $region20: #{tpu_custom_call.1} parent=1 // pred_region
      %42 = dma.done [#allocation7], 6144
    $region21: #{tpu_custom_call.1} parent=1 // pred_fallthru
      _
    %p43 = scmp.eq.s32.totalorder 0, 0
    // Predicated region
    $region22: #{tpu_custom_call.1} parent=1 // pred_check
      %p44 = pneg %p43
    $region23: #{tpu_custom_call.1} parent=1 // pred_check_branch
      %46 = sbr.rel (%p44) target = $region25
    $region24: #{tpu_custom_call.1} parent=1 // pred_region
      %47 = vst [vmem:[#allocation2] sm:$0xff] 0.0
    $region25: #{tpu_custom_call.1} parent=1 // pred_fallthru
      _
    %v48 = vld [vmem:[#allocation6] sm:$0xff]
    %v49 = vld [vmem:[#allocation6 + $0x8] sm:$0xff]
    %v50 = vld [vmem:[#allocation6 + $0x10] sm:$0xff]
    %v51 = vld [vmem:[#allocation6 + $0x18] sm:$0xff]
    %v52 = vld [vmem:[#allocation6 + $0x20] sm:$0xff]
    %v53 = vld [vmem:[#allocation6 + $0x28] sm:$0xff]
    %v54 = vld [vmem:[#allocation6 + $0x30] sm:$0xff]
    %v55 = vld [vmem:[#allocation6 + $0x38] sm:$0xff]
    %v56 = vld [vmem:[#allocation6 + $0x40] sm:$0xff]
    %v57 = vld [vmem:[#allocation6 + $0x48] sm:$0xff]
    %v58 = vld [vmem:[#allocation6 + $0x50] sm:$0xff]
    %v59 = vld [vmem:[#allocation6 + $0x58] sm:$0xff]
    %v60 = vld [vmem:[#allocation6 + $0x60] sm:$0xff]
    %v61 = vld [vmem:[#allocation6 + $0x68] sm:$0xff]
    %v62 = vld [vmem:[#allocation6 + $0x70] sm:$0xff]
    %v63 = vld [vmem:[#allocation6 + $0x78] sm:$0xff]
    %v64 = vld [vmem:[#allocation6 + $0x80] sm:$0xff]
    %v65 = vld [vmem:[#allocation6 + $0x88] sm:$0xff]
    %v66 = vld [vmem:[#allocation6 + $0x90] sm:$0xff]
    %v67 = vld [vmem:[#allocation6 + $0x98] sm:$0xff]
    %v68 = vld [vmem:[#allocation6 + $0xa0] sm:$0xff]
    %v69 = vld [vmem:[#allocation6 + $0xa8] sm:$0xff]
    %v70 = vld [vmem:[#allocation6 + $0xb0] sm:$0xff]
    %v71 = vld [vmem:[#allocation6 + $0xb8] sm:$0xff]
    %v72 = vld [vmem:[#allocation6 + $0xc0] sm:$0xff]
    %v73 = vld [vmem:[#allocation6 + $0xc8] sm:$0xff]
    %v74 = vld [vmem:[#allocation6 + $0xd0] sm:$0xff]
    %v75 = vld [vmem:[#allocation6 + $0xd8] sm:$0xff]
    %v76 = vld [vmem:[#allocation6 + $0xe0] sm:$0xff]
    %v77 = vld [vmem:[#allocation6 + $0xe8] sm:$0xff]
    %v78 = vld [vmem:[#allocation6 + $0xf0] sm:$0xff]
    %v79 = vld [vmem:[#allocation6 + $0xf8] sm:$0xff]
    %v80 = vld [vmem:[#allocation6 + $0x100] sm:$0xff]
    %v81 = vld [vmem:[#allocation6 + $0x108] sm:$0xff]
    %v82 = vld [vmem:[#allocation6 + $0x110] sm:$0xff]
    %v83 = vld [vmem:[#allocation6 + $0x118] sm:$0xff]
    %v84 = vld [vmem:[#allocation6 + $0x120] sm:$0xff]
    %v85 = vld [vmem:[#allocation6 + $0x128] sm:$0xff]
    %v86 = vld [vmem:[#allocation6 + $0x130] sm:$0xff]
    %v87 = vld [vmem:[#allocation6 + $0x138] sm:$0xff]
    %v88 = vld [vmem:[#allocation6 + $0x140] sm:$0xff]
    %v89 = vld [vmem:[#allocation6 + $0x148] sm:$0xff]
    %v90 = vld [vmem:[#allocation6 + $0x150] sm:$0xff]
    %v91 = vld [vmem:[#allocation6 + $0x158] sm:$0xff]
    %v92 = vld [vmem:[#allocation6 + $0x160] sm:$0xff]
    %v93 = vld [vmem:[#allocation6 + $0x168] sm:$0xff]
    %v94 = vld [vmem:[#allocation6 + $0x170] sm:$0xff]
    %v95 = vld [vmem:[#allocation6 + $0x178] sm:$0xff]
    %v96 = vld [vmem:[%s2] sm:$0x1]
    %v98 = vlaneseq
    %v99 = vshrl.u32 %v98, 7
    %v100 = vsub.s32 0, %v99
    %v101 = vrot.slane %v96, %v100
    %v103 = vld [vmem:[#allocation2] sm:$0xff]
    %v104 = vld [vmem:[#allocation3] sm:$0xff]
    %v105 = vld [vmem:[#allocation3 + $0x8] sm:$0xff]
    %v106 = vld [vmem:[#allocation3 + $0x10] sm:$0xff]
    %107 = vmatprep.subr.mxu0 %v94
    %108 = vmatpush1.msra.mxu0 %v93
    %109 = vmatprep.subr.mxu0 %v91
    %110 = vmatpush1.msra.mxu0 %v90
    %111 = vmatprep.subr.mxu0 %v88
    %112 = vmatpush1.msra.mxu0 %v87
    %113 = vmatprep.subr.mxu0 %v85
    %114 = vmatpush1.msra.mxu0 %v84
    %115 = vmatprep.subr.mxu0 %v82
    %116 = vmatpush1.msra.mxu0 %v81
    %117 = vmatprep.subr.mxu0 %v79
    %118 = vmatpush1.msra.mxu0 %v78
    %119 = vmatprep.subr.mxu0 %v76
    %120 = vmatpush1.msra.mxu0 %v75
    %121 = vmatprep.subr.mxu0 %v73
    %122 = vmatpush1.msra.mxu0 %v72
    %123 = vmatprep.subr.mxu0 %v70
    %124 = vmatpush1.msra.mxu0 %v69
    %125 = vmatprep.subr.mxu0 %v67
    %126 = vmatpush1.msra.mxu0 %v66
    %127 = vmatprep.subr.mxu0 %v64
    %128 = vmatpush1.msra.mxu0 %v63
    %129 = vmatprep.subr.mxu0 %v61
    %130 = vmatpush1.msra.mxu0 %v60
    %131 = vmatprep.subr.mxu0 %v58
    %132 = vmatpush1.msra.mxu0 %v57
    %133 = vmatprep.subr.mxu0 %v55
    %134 = vmatpush1.msra.mxu0 %v54
    %135 = vmatprep.subr.mxu0 %v52
    %136 = vmatpush1.msra.mxu0 %v51
    %137 = vmatprep.subr.mxu0 %v49
    %138 = vmatpush1.msra.mxu0 %v48
    %139 = vmatprep.subr.mxu0 0.0
    %140 = vmatpush2.msra.mxu0 0.0
    %141 = vmatprep.subr.mxu0 0.0
    %142 = vmatpush2.msra.mxu0 0.0
    %143 = vmatprep.subr.mxu0 0.0
    %144 = vmatpush2.msra.mxu0 0.0
    %145 = vmatprep.subr.mxu0 0.0
    %146 = vmatpush2.msra.mxu0 0.0
    %147 = vmatprep.subr.mxu0 0.0
    %148 = vmatpush2.msra.mxu0 0.0
    %149 = vmatprep.subr.mxu0 0.0
    %150 = vmatpush2.msra.mxu0 0.0
    %151 = vmatprep.subr.mxu0 0.0
    %152 = vmatpush2.msra.mxu0 0.0
    %153 = vmatprep.subr.mxu0 0.0
    %154 = vmatpush2.msra.mxu0 0.0
    %155 = vmatprep.subr.mxu0 0.0
    %156 = vmatpush2.msra.mxu0 0.0
    %157 = vmatprep.subr.mxu0 0.0
    %158 = vmatpush2.msra.mxu0 0.0
    %159 = vmatprep.subr.mxu0 0.0
    %160 = vmatpush2.msra.mxu0 0.0
    %161 = vmatprep.subr.mxu0 0.0
    %162 = vmatpush2.msra.mxu0 0.0
    %163 = vmatprep.subr.mxu0 0.0
    %164 = vmatpush2.msra.mxu0 0.0
    %165 = vmatprep.subr.mxu0 0.0
    %166 = vmatpush2.msra.mxu0 0.0
    %167 = vmatprep.subr.mxu0 0.0
    %168 = vmatpush2.msra.mxu0 0.0
    %169 = vmatprep.subr.mxu0 0.0
    %170 = vmatpush2.msra.mxu0 0.0
    %171 = vmatprep.mubr.f32.mxu0 0.0
    %172 = vmatmul.mubr.f32.gmra.mxu0 %v103
    %v173 = vpop.f32.mrf.mxu0
    %v174 = vadd.f32 0.0, %v173
    %v175 = vpop.f32.mrf.mxu0
    %v176 = vadd.f32 0.0, %v175
    %177 = vdwg.mxu0
    %178 = vmatprep.subr.mxu0 0.0
    %179 = vmatpush1.msra.mxu0 %v95
    %180 = vmatprep.subr.mxu0 0.0
    %181 = vmatpush1.msra.mxu0 %v92
    %182 = vmatprep.subr.mxu0 0.0
    %183 = vmatpush1.msra.mxu0 %v89
    %184 = vmatprep.subr.mxu0 0.0
    %185 = vmatpush1.msra.mxu0 %v86
    %186 = vmatprep.subr.mxu0 0.0
    %187 = vmatpush1.msra.mxu0 %v83
    %188 = vmatprep.subr.mxu0 0.0
    %189 = vmatpush1.msra.mxu0 %v80
    %190 = vmatprep.subr.mxu0 0.0
    %191 = vmatpush1.msra.mxu0 %v77
    %192 = vmatprep.subr.mxu0 0.0
    %193 = vmatpush1.msra.mxu0 %v74
    %194 = vmatprep.subr.mxu0 0.0
    %195 = vmatpush1.msra.mxu0 %v71
    %196 = vmatprep.subr.mxu0 0.0
    %197 = vmatpush1.msra.mxu0 %v68
    %198 = vmatprep.subr.mxu0 0.0
    %199 = vmatpush1.msra.mxu0 %v65
    %200 = vmatprep.subr.mxu0 0.0
    %201 = vmatpush1.msra.mxu0 %v62
    %202 = vmatprep.subr.mxu0 0.0
    %203 = vmatpush1.msra.mxu0 %v59
    %204 = vmatprep.subr.mxu0 0.0
    %205 = vmatpush1.msra.mxu0 %v56
    %206 = vmatprep.subr.mxu0 0.0
    %207 = vmatpush1.msra.mxu0 %v53
    %208 = vmatprep.subr.mxu0 0.0
    %209 = vmatpush1.msra.mxu0 %v50
    %210 = vmatprep.subr.mxu0 0.0
    %211 = vmatpush2.msra.mxu0 0.0
    %212 = vmatprep.subr.mxu0 0.0
    %213 = vmatpush2.msra.mxu0 0.0
    %214 = vmatprep.subr.mxu0 0.0
    %215 = vmatpush2.msra.mxu0 0.0
    %216 = vmatprep.subr.mxu0 0.0
    %217 = vmatpush2.msra.mxu0 0.0
    %218 = vmatprep.subr.mxu0 0.0
    %219 = vmatpush2.msra.mxu0 0.0
    %220 = vmatprep.subr.mxu0 0.0
    %221 = vmatpush2.msra.mxu0 0.0
    %222 = vmatprep.subr.mxu0 0.0
    %223 = vmatpush2.msra.mxu0 0.0
    %224 = vmatprep.subr.mxu0 0.0
    %225 = vmatpush2.msra.mxu0 0.0
    %226 = vmatprep.subr.mxu0 0.0
    %227 = vmatpush2.msra.mxu0 0.0
    %228 = vmatprep.subr.mxu0 0.0
    %229 = vmatpush2.msra.mxu0 0.0
    %230 = vmatprep.subr.mxu0 0.0
    %231 = vmatpush2.msra.mxu0 0.0
    %232 = vmatprep.subr.mxu0 0.0
    %233 = vmatpush2.msra.mxu0 0.0
    %234 = vmatprep.subr.mxu0 0.0
    %235 = vmatpush2.msra.mxu0 0.0
    %236 = vmatprep.subr.mxu0 0.0
    %237 = vmatpush2.msra.mxu0 0.0
    %238 = vmatprep.subr.mxu0 0.0
    %239 = vmatpush2.msra.mxu0 0.0
    %240 = vmatprep.subr.mxu0 0.0
    %241 = vmatpush2.msra.mxu0 0.0
    %242 = vmatprep.mubr.f32.mxu0 0.0
    %243 = vmatmul.mubr.f32.gmra.mxu0 %v103
    %v244 = vpop.f32.mrf.mxu0
    %v245 = vadd.f32 0.0, %v244
    %v246 = vpop.f32.mrf.mxu0
    %247 = vdwg.mxu0
    %v248 = vadd.f32 %v104, %v174
    %v249 = vxor.u32 %v248, 2147483648
    %v250 = vmul.f32 %v249, 1.442695
    %v251 = vpow.pop %v250
    %v252 = vadd.f32 %v251, 1.0
    %v253 = vrcp.pop %v252
    %v254 = vmul.f32 1.0, %v253
    %v255 = vadd.f32 %v105, %v176
    %v256 = vxor.u32 %v255, 2147483648
    %v257 = vmul.f32 %v256, 1.442695
    %v258 = vpow.pop %v257
    %v259 = vadd.f32 %v258, 1.0
    %v260 = vrcp.pop %v259
    %v261 = vmul.f32 1.0, %v260
    %v262 = vadd.f32 %v245, %v101
    %v263 = vmul.f32 %v254, %v262
    %v264 = vadd.f32 %v106, %v263
    %v265 = vtanh.pop %v264
    %v266 = vsub.f32 1.0, %v261
    %v267 = vmul.f32 %v266, %v265
    %v268 = vmul.f32 %v261, %v103
    %v269 = vadd.f32 %v267, %v268
    %s270 = scalar_lea.vmem [#allocation3], 24
    %v271 = vld [vmem:[%s270] sm:$0xff]
    %v272 = vld [vmem:[%s270 + $0x8] sm:$0xff]
    %v273 = vld [vmem:[%s270 + $0x10] sm:$0xff]
    %274 = vmatprep.subr.mxu0 %v94
    %275 = vmatpush1.msra.mxu0 %v93
    %276 = vmatprep.subr.mxu0 %v91
    %277 = vmatpush1.msra.mxu0 %v90
    %278 = vmatprep.subr.mxu0 %v88
    %279 = vmatpush1.msra.mxu0 %v87
    %280 = vmatprep.subr.mxu0 %v85
    %281 = vmatpush1.msra.mxu0 %v84
    %282 = vmatprep.subr.mxu0 %v82
    %283 = vmatpush1.msra.mxu0 %v81
    %284 = vmatprep.subr.mxu0 %v79
    %285 = vmatpush1.msra.mxu0 %v78
    %286 = vmatprep.subr.mxu0 %v76
    %287 = vmatpush1.msra.mxu0 %v75
    %288 = vmatprep.subr.mxu0 %v73
    %289 = vmatpush1.msra.mxu0 %v72
    %290 = vmatprep.subr.mxu0 %v70
    %291 = vmatpush1.msra.mxu0 %v69
    %292 = vmatprep.subr.mxu0 %v67
    %293 = vmatpush1.msra.mxu0 %v66
    %294 = vmatprep.subr.mxu0 %v64
    %295 = vmatpush1.msra.mxu0 %v63
    %296 = vmatprep.subr.mxu0 %v61
    %297 = vmatpush1.msra.mxu0 %v60
    %298 = vmatprep.subr.mxu0 %v58
    %299 = vmatpush1.msra.mxu0 %v57
    %300 = vmatprep.subr.mxu0 %v55
    %301 = vmatpush1.msra.mxu0 %v54
    %302 = vmatprep.subr.mxu0 %v52
    %303 = vmatpush1.msra.mxu0 %v51
    %304 = vmatprep.subr.mxu0 %v49
    %305 = vmatpush1.msra.mxu0 %v48
    %306 = vmatprep.subr.mxu0 0.0
    %307 = vmatpush2.msra.mxu0 0.0
    %308 = vmatprep.subr.mxu0 0.0
    %309 = vmatpush2.msra.mxu0 0.0
    %310 = vmatprep.subr.mxu0 0.0
    %311 = vmatpush2.msra.mxu0 0.0
    %312 = vmatprep.subr.mxu0 0.0
    %313 = vmatpush2.msra.mxu0 0.0
    %314 = vmatprep.subr.mxu0 0.0
    %315 = vmatpush2.msra.mxu0 0.0
    %316 = vmatprep.subr.mxu0 0.0
    %317 = vmatpush2.msra.mxu0 0.0
    %318 = vmatprep.subr.mxu0 0.0
    %319 = vmatpush2.msra.mxu0 0.0
    %320 = vmatprep.subr.mxu0 0.0
    %321 = vmatpush2.msra.mxu0 0.0
    %322 = vmatprep.subr.mxu0 0.0
    %323 = vmatpush2.msra.mxu0 0.0
    %324 = vmatprep.subr.mxu0 0.0
    %325 = vmatpush2.msra.mxu0 0.0
    %326 = vmatprep.subr.mxu0 0.0
    %327 = vmatpush2.msra.mxu0 0.0
    %328 = vmatprep.subr.mxu0 0.0
    %329 = vmatpush2.msra.mxu0 0.0
    %330 = vmatprep.subr.mxu0 0.0
    %331 = vmatpush2.msra.mxu0 0.0
    %332 = vmatprep.subr.mxu0 0.0
    %333 = vmatpush2.msra.mxu0 0.0
    %334 = vmatprep.subr.mxu0 0.0
    %335 = vmatpush2.msra.mxu0 0.0
    %336 = vmatprep.subr.mxu0 0.0
    %337 = vmatpush2.msra.mxu0 0.0
    %338 = vmatprep.mubr.f32.mxu0 0.0
    %339 = vmatmul.mubr.f32.gmra.mxu0 %v269
    %v340 = vpop.f32.mrf.mxu0
    %v341 = vadd.f32 0.0, %v340
    %v342 = vpop.f32.mrf.mxu0
    %v343 = vadd.f32 0.0, %v342
    %344 = vdwg.mxu0
    %345 = vmatprep.subr.mxu0 0.0
    %346 = vmatpush1.msra.mxu0 %v95
    %347 = vmatprep.subr.mxu0 0.0
    %348 = vmatpush1.msra.mxu0 %v92
    %349 = vmatprep.subr.mxu0 0.0
    %350 = vmatpush1.msra.mxu0 %v89
    %351 = vmatprep.subr.mxu0 0.0
    %352 = vmatpush1.msra.mxu0 %v86
    %353 = vmatprep.subr.mxu0 0.0
    %354 = vmatpush1.msra.mxu0 %v83
    %355 = vmatprep.subr.mxu0 0.0
    %356 = vmatpush1.msra.mxu0 %v80
    %357 = vmatprep.subr.mxu0 0.0
    %358 = vmatpush1.msra.mxu0 %v77
    %359 = vmatprep.subr.mxu0 0.0
    %360 = vmatpush1.msra.mxu0 %v74
    %361 = vmatprep.subr.mxu0 0.0
    %362 = vmatpush1.msra.mxu0 %v71
    %363 = vmatprep.subr.mxu0 0.0
    %364 = vmatpush1.msra.mxu0 %v68
    %365 = vmatprep.subr.mxu0 0.0
    %366 = vmatpush1.msra.mxu0 %v65
    %367 = vmatprep.subr.mxu0 0.0
    %368 = vmatpush1.msra.mxu0 %v62
    %369 = vmatprep.subr.mxu0 0.0
    %370 = vmatpush1.msra.mxu0 %v59
    %371 = vmatprep.subr.mxu0 0.0
    %372 = vmatpush1.msra.mxu0 %v56
    %373 = vmatprep.subr.mxu0 0.0
    %374 = vmatpush1.msra.mxu0 %v53
    %375 = vmatprep.subr.mxu0 0.0
    %376 = vmatpush1.msra.mxu0 %v50
    %377 = vmatprep.subr.mxu0 0.0
    %378 = vmatpush2.msra.mxu0 0.0
    %379 = vmatprep.subr.mxu0 0.0
    %380 = vmatpush2.msra.mxu0 0.0
    %381 = vmatprep.subr.mxu0 0.0
    %382 = vmatpush2.msra.mxu0 0.0
    %383 = vmatprep.subr.mxu0 0.0
    %384 = vmatpush2.msra.mxu0 0.0
    %385 = vmatprep.subr.mxu0 0.0
    %386 = vmatpush2.msra.mxu0 0.0
    %387 = vmatprep.subr.mxu0 0.0
    %388 = vmatpush2.msra.mxu0 0.0
    %389 = vmatprep.subr.mxu0 0.0
    %390 = vmatpush2.msra.mxu0 0.0
    %391 = vmatprep.subr.mxu0 0.0
    %392 = vmatpush2.msra.mxu0 0.0
    %393 = vmatprep.subr.mxu0 0.0
    %394 = vmatpush2.msra.mxu0 0.0
    %395 = vmatprep.subr.mxu0 0.0
    %396 = vmatpush2.msra.mxu0 0.0
    %397 = vmatprep.subr.mxu0 0.0
    %398 = vmatpush2.msra.mxu0 0.0
    %399 = vmatprep.subr.mxu0 0.0
    %400 = vmatpush2.msra.mxu0 0.0
    %401 = vmatprep.subr.mxu0 0.0
    %402 = vmatpush2.msra.mxu0 0.0
    %403 = vmatprep.subr.mxu0 0.0
    %404 = vmatpush2.msra.mxu0 0.0
    %405 = vmatprep.subr.mxu0 0.0
    %406 = vmatpush2.msra.mxu0 0.0
    %407 = vmatprep.subr.mxu0 0.0
    %408 = vmatpush2.msra.mxu0 0.0
    %409 = vmatprep.mubr.f32.mxu0 0.0
    %410 = vmatmul.mubr.f32.gmra.mxu0 %v269
    %v411 = vpop.f32.mrf.mxu0
    %v412 = vadd.f32 0.0, %v411
    %v413 = vpop.f32.mrf.mxu0
    %414 = vdwg.mxu0
    %v415 = vadd.f32 %v271, %v341
    %v416 = vxor.u32 %v415, 2147483648
    %v417 = vmul.f32 %v416, 1.442695
    %v418 = vpow.pop %v417
    %v419 = vadd.f32 %v418, 1.0
    %v420 = vrcp.pop %v419
    %v421 = vmul.f32 1.0, %v420
    %v422 = vadd.f32 %v272, %v343
    %v423 = vxor.u32 %v422, 2147483648
    %v424 = vmul.f32 %v423, 1.442695
    %v425 = vpow.pop %v424
    %v426 = vadd.f32 %v425, 1.0
    %v427 = vrcp.pop %v426
    %v428 = vmul.f32 1.0, %v427
    %v429 = vadd.f32 %v412, %v101
    %v430 = vmul.f32 %v421, %v429
    %v431 = vadd.f32 %v273, %v430
    %v432 = vtanh.pop %v431
    %v433 = vsub.f32 1.0, %v428
    %v434 = vmul.f32 %v433, %v432
    %v435 = vmul.f32 %v428, %v269
    %v436 = vadd.f32 %v434, %v435
    %s437 = scalar_lea.vmem [#allocation3], 48
    %v438 = vld [vmem:[%s437] sm:$0xff]
    %v439 = vld [vmem:[%s437 + $0x8] sm:$0xff]
    %v440 = vld [vmem:[%s437 + $0x10] sm:$0xff]
    %441 = vmatprep.subr.mxu0 %v94
    %442 = vmatpush1.msra.mxu0 %v93
    %443 = vmatprep.subr.mxu0 %v91
    %444 = vmatpush1.msra.mxu0 %v90
    %445 = vmatprep.subr.mxu0 %v88
    %446 = vmatpush1.msra.mxu0 %v87
    %447 = vmatprep.subr.mxu0 %v85
    %448 = vmatpush1.msra.mxu0 %v84
    %449 = vmatprep.subr.mxu0 %v82
    %450 = vmatpush1.msra.mxu0 %v81
    %451 = vmatprep.subr.mxu0 %v79
    %452 = vmatpush1.msra.mxu0 %v78
    %453 = vmatprep.subr.mxu0 %v76
    %454 = vmatpush1.msra.mxu0 %v75
    %455 = vmatprep.subr.mxu0 %v73
    %456 = vmatpush1.msra.mxu0 %v72
    %457 = vmatprep.subr.mxu0 %v70
    %458 = vmatpush1.msra.mxu0 %v69
    %459 = vmatprep.subr.mxu0 %v67
    %460 = vmatpush1.msra.mxu0 %v66
    %461 = vmatprep.subr.mxu0 %v64
    %462 = vmatpush1.msra.mxu0 %v63
    %463 = vmatprep.subr.mxu0 %v61
    %464 = vmatpush1.msra.mxu0 %v60
    %465 = vmatprep.subr.mxu0 %v58
    %466 = vmatpush1.msra.mxu0 %v57
    %467 = vmatprep.subr.mxu0 %v55
    %468 = vmatpush1.msra.mxu0 %v54
    %469 = vmatprep.subr.mxu0 %v52
    %470 = vmatpush1.msra.mxu0 %v51
    %471 = vmatprep.subr.mxu0 %v49
    %472 = vmatpush1.msra.mxu0 %v48
    %473 = vmatprep.subr.mxu0 0.0
    %474 = vmatpush2.msra.mxu0 0.0
    %475 = vmatprep.subr.mxu0 0.0
    %476 = vmatpush2.msra.mxu0 0.0
    %477 = vmatprep.subr.mxu0 0.0
    %478 = vmatpush2.msra.mxu0 0.0
    %479 = vmatprep.subr.mxu0 0.0
    %480 = vmatpush2.msra.mxu0 0.0
    %481 = vmatprep.subr.mxu0 0.0
    %482 = vmatpush2.msra.mxu0 0.0
    %483 = vmatprep.subr.mxu0 0.0
    %484 = vmatpush2.msra.mxu0 0.0
    %485 = vmatprep.subr.mxu0 0.0
    %486 = vmatpush2.msra.mxu0 0.0
    %487 = vmatprep.subr.mxu0 0.0
    %488 = vmatpush2.msra.mxu0 0.0
    %489 = vmatprep.subr.mxu0 0.0
    %490 = vmatpush2.msra.mxu0 0.0
    %491 = vmatprep.subr.mxu0 0.0
    %492 = vmatpush2.msra.mxu0 0.0
    %493 = vmatprep.subr.mxu0 0.0
    %494 = vmatpush2.msra.mxu0 0.0
    %495 = vmatprep.subr.mxu0 0.0
    %496 = vmatpush2.msra.mxu0 0.0
    %497 = vmatprep.subr.mxu0 0.0
    %498 = vmatpush2.msra.mxu0 0.0
    %499 = vmatprep.subr.mxu0 0.0
    %500 = vmatpush2.msra.mxu0 0.0
    %501 = vmatprep.subr.mxu0 0.0
    %502 = vmatpush2.msra.mxu0 0.0
    %503 = vmatprep.subr.mxu0 0.0
    %504 = vmatpush2.msra.mxu0 0.0
    %505 = vmatprep.mubr.f32.mxu0 0.0
    %506 = vmatmul.mubr.f32.gmra.mxu0 %v436
    %v507 = vpop.f32.mrf.mxu0
    %v508 = vadd.f32 0.0, %v507
    %v509 = vpop.f32.mrf.mxu0
    %v510 = vadd.f32 0.0, %v509
    %511 = vdwg.mxu0
    %512 = vmatprep.subr.mxu0 0.0
    %513 = vmatpush1.msra.mxu0 %v95
    %514 = vmatprep.subr.mxu0 0.0
    %515 = vmatpush1.msra.mxu0 %v92
    %516 = vmatprep.subr.mxu0 0.0
    %517 = vmatpush1.msra.mxu0 %v89
    %518 = vmatprep.subr.mxu0 0.0
    %519 = vmatpush1.msra.mxu0 %v86
    %520 = vmatprep.subr.mxu0 0.0
    %521 = vmatpush1.msra.mxu0 %v83
    %522 = vmatprep.subr.mxu0 0.0
    %523 = vmatpush1.msra.mxu0 %v80
    %524 = vmatprep.subr.mxu0 0.0
    %525 = vmatpush1.msra.mxu0 %v77
    %526 = vmatprep.subr.mxu0 0.0
    %527 = vmatpush1.msra.mxu0 %v74
    %528 = vmatprep.subr.mxu0 0.0
    %529 = vmatpush1.msra.mxu0 %v71
    %530 = vmatprep.subr.mxu0 0.0
    %531 = vmatpush1.msra.mxu0 %v68
    %532 = vmatprep.subr.mxu0 0.0
    %533 = vmatpush1.msra.mxu0 %v65
    %534 = vmatprep.subr.mxu0 0.0
    %535 = vmatpush1.msra.mxu0 %v62
    %536 = vmatprep.subr.mxu0 0.0
    %537 = vmatpush1.msra.mxu0 %v59
    %538 = vmatprep.subr.mxu0 0.0
    %539 = vmatpush1.msra.mxu0 %v56
    %540 = vmatprep.subr.mxu0 0.0
    %541 = vmatpush1.msra.mxu0 %v53
    %542 = vmatprep.subr.mxu0 0.0
    %543 = vmatpush1.msra.mxu0 %v50
    %544 = vmatprep.subr.mxu0 0.0
    %545 = vmatpush2.msra.mxu0 0.0
    %546 = vmatprep.subr.mxu0 0.0
    %547 = vmatpush2.msra.mxu0 0.0
    %548 = vmatprep.subr.mxu0 0.0
    %549 = vmatpush2.msra.mxu0 0.0
    %550 = vmatprep.subr.mxu0 0.0
    %551 = vmatpush2.msra.mxu0 0.0
    %552 = vmatprep.subr.mxu0 0.0
    %553 = vmatpush2.msra.mxu0 0.0
    %554 = vmatprep.subr.mxu0 0.0
    %555 = vmatpush2.msra.mxu0 0.0
    %556 = vmatprep.subr.mxu0 0.0
    %557 = vmatpush2.msra.mxu0 0.0
    %558 = vmatprep.subr.mxu0 0.0
    %559 = vmatpush2.msra.mxu0 0.0
    %560 = vmatprep.subr.mxu0 0.0
    %561 = vmatpush2.msra.mxu0 0.0
    %562 = vmatprep.subr.mxu0 0.0
    %563 = vmatpush2.msra.mxu0 0.0
    %564 = vmatprep.subr.mxu0 0.0
    %565 = vmatpush2.msra.mxu0 0.0
    %566 = vmatprep.subr.mxu0 0.0
    %567 = vmatpush2.msra.mxu0 0.0
    %568 = vmatprep.subr.mxu0 0.0
    %569 = vmatpush2.msra.mxu0 0.0
    %570 = vmatprep.subr.mxu0 0.0
    %571 = vmatpush2.msra.mxu0 0.0
    %572 = vmatprep.subr.mxu0 0.0
    %573 = vmatpush2.msra.mxu0 0.0
    %574 = vmatprep.subr.mxu0 0.0
    %575 = vmatpush2.msra.mxu0 0.0
    %576 = vmatprep.mubr.f32.mxu0 0.0
    %577 = vmatmul.mubr.f32.gmra.mxu0 %v436
    %v578 = vpop.f32.mrf.mxu0
    %v579 = vadd.f32 0.0, %v578
    %v580 = vpop.f32.mrf.mxu0
    %581 = vdwg.mxu0
    %v582 = vadd.f32 %v438, %v508
    %v583 = vxor.u32 %v582, 2147483648
    %v584 = vmul.f32 %v583, 1.442695
    %v585 = vpow.pop %v584
    %v586 = vadd.f32 %v585, 1.0
    %v587 = vrcp.pop %v586
    %v588 = vmul.f32 1.0, %v587
    %v589 = vadd.f32 %v439, %v510
    %v590 = vxor.u32 %v589, 2147483648
    %v591 = vmul.f32 %v590, 1.442695
    %v592 = vpow.pop %v591
    %v593 = vadd.f32 %v592, 1.0
    %v594 = vrcp.pop %v593
    %v595 = vmul.f32 1.0, %v594
    %v596 = vadd.f32 %v579, %v101
    %v597 = vmul.f32 %v588, %v596
    %v598 = vadd.f32 %v440, %v597
    %v599 = vtanh.pop %v598
    %v600 = vsub.f32 1.0, %v595
    %v601 = vmul.f32 %v600, %v599
    %v602 = vmul.f32 %v595, %v436
    %v603 = vadd.f32 %v601, %v602
    %s604 = scalar_lea.vmem [#allocation3], 72
    %v605 = vld [vmem:[%s604] sm:$0xff]
    %v606 = vld [vmem:[%s604 + $0x8] sm:$0xff]
    %v607 = vld [vmem:[%s604 + $0x10] sm:$0xff]
    %608 = vmatprep.subr.mxu0 %v94
    %609 = vmatpush1.msra.mxu0 %v93
    %610 = vmatprep.subr.mxu0 %v91
    %611 = vmatpush1.msra.mxu0 %v90
    %612 = vmatprep.subr.mxu0 %v88
    %613 = vmatpush1.msra.mxu0 %v87
    %614 = vmatprep.subr.mxu0 %v85
    %615 = vmatpush1.msra.mxu0 %v84
    %616 = vmatprep.subr.mxu0 %v82
    %617 = vmatpush1.msra.mxu0 %v81
    %618 = vmatprep.subr.mxu0 %v79
    %619 = vmatpush1.msra.mxu0 %v78
    %620 = vmatprep.subr.mxu0 %v76
    %621 = vmatpush1.msra.mxu0 %v75
    %622 = vmatprep.subr.mxu0 %v73
    %623 = vmatpush1.msra.mxu0 %v72
    %624 = vmatprep.subr.mxu0 %v70
    %625 = vmatpush1.msra.mxu0 %v69
    %626 = vmatprep.subr.mxu0 %v67
    %627 = vmatpush1.msra.mxu0 %v66
    %628 = vmatprep.subr.mxu0 %v64
    %629 = vmatpush1.msra.mxu0 %v63
    %630 = vmatprep.subr.mxu0 %v61
    %631 = vmatpush1.msra.mxu0 %v60
    %632 = vmatprep.subr.mxu0 %v58
    %633 = vmatpush1.msra.mxu0 %v57
    %634 = vmatprep.subr.mxu0 %v55
    %635 = vmatpush1.msra.mxu0 %v54
    %636 = vmatprep.subr.mxu0 %v52
    %637 = vmatpush1.msra.mxu0 %v51
    %638 = vmatprep.subr.mxu0 %v49
    %639 = vmatpush1.msra.mxu0 %v48
    %640 = vmatprep.subr.mxu0 0.0
    %641 = vmatpush2.msra.mxu0 0.0
    %642 = vmatprep.subr.mxu0 0.0
    %643 = vmatpush2.msra.mxu0 0.0
    %644 = vmatprep.subr.mxu0 0.0
    %645 = vmatpush2.msra.mxu0 0.0
    %646 = vmatprep.subr.mxu0 0.0
    %647 = vmatpush2.msra.mxu0 0.0
    %648 = vmatprep.subr.mxu0 0.0
    %649 = vmatpush2.msra.mxu0 0.0
    %650 = vmatprep.subr.mxu0 0.0
    %651 = vmatpush2.msra.mxu0 0.0
    %652 = vmatprep.subr.mxu0 0.0
    %653 = vmatpush2.msra.mxu0 0.0
    %654 = vmatprep.subr.mxu0 0.0
    %655 = vmatpush2.msra.mxu0 0.0
    %656 = vmatprep.subr.mxu0 0.0
    %657 = vmatpush2.msra.mxu0 0.0
    %658 = vmatprep.subr.mxu0 0.0
    %659 = vmatpush2.msra.mxu0 0.0
    %660 = vmatprep.subr.mxu0 0.0
    %661 = vmatpush2.msra.mxu0 0.0
    %662 = vmatprep.subr.mxu0 0.0
    %663 = vmatpush2.msra.mxu0 0.0
    %664 = vmatprep.subr.mxu0 0.0
    %665 = vmatpush2.msra.mxu0 0.0
    %666 = vmatprep.subr.mxu0 0.0
    %667 = vmatpush2.msra.mxu0 0.0
    %668 = vmatprep.subr.mxu0 0.0
    %669 = vmatpush2.msra.mxu0 0.0
    %670 = vmatprep.subr.mxu0 0.0
    %671 = vmatpush2.msra.mxu0 0.0
    %672 = vmatprep.mubr.f32.mxu0 0.0
    %673 = vmatmul.mubr.f32.gmra.mxu0 %v603
    %v674 = vpop.f32.mrf.mxu0
    %v675 = vadd.f32 0.0, %v674
    %v676 = vpop.f32.mrf.mxu0
    %v677 = vadd.f32 0.0, %v676
    %678 = vdwg.mxu0
    %679 = vmatprep.subr.mxu0 0.0
    %680 = vmatpush1.msra.mxu0 %v95
    %681 = vmatprep.subr.mxu0 0.0
    %682 = vmatpush1.msra.mxu0 %v92
    %683 = vmatprep.subr.mxu0 0.0
    %684 = vmatpush1.msra.mxu0 %v89
    %685 = vmatprep.subr.mxu0 0.0
    %686 = vmatpush1.msra.mxu0 %v86
    %687 = vmatprep.subr.mxu0 0.0
    %688 = vmatpush1.msra.mxu0 %v83
    %689 = vmatprep.subr.mxu0 0.0
    %690 = vmatpush1.msra.mxu0 %v80
    %691 = vmatprep.subr.mxu0 0.0
    %692 = vmatpush1.msra.mxu0 %v77
    %693 = vmatprep.subr.mxu0 0.0
    %694 = vmatpush1.msra.mxu0 %v74
    %695 = vmatprep.subr.mxu0 0.0
    %696 = vmatpush1.msra.mxu0 %v71
    %697 = vmatprep.subr.mxu0 0.0
    %698 = vmatpush1.msra.mxu0 %v68
    %699 = vmatprep.subr.mxu0 0.0
    %700 = vmatpush1.msra.mxu0 %v65
    %701 = vmatprep.subr.mxu0 0.0
    %702 = vmatpush1.msra.mxu0 %v62
    %703 = vmatprep.subr.mxu0 0.0
    %704 = vmatpush1.msra.mxu0 %v59
    %705 = vmatprep.subr.mxu0 0.0
    %706 = vmatpush1.msra.mxu0 %v56
    %707 = vmatprep.subr.mxu0 0.0
    %708 = vmatpush1.msra.mxu0 %v53
    %709 = vmatprep.subr.mxu0 0.0
    %710 = vmatpush1.msra.mxu0 %v50
    %711 = vmatprep.subr.mxu0 0.0
    %712 = vmatpush2.msra.mxu0 0.0
    %713 = vmatprep.subr.mxu0 0.0
    %714 = vmatpush2.msra.mxu0 0.0
    %715 = vmatprep.subr.mxu0 0.0
    %716 = vmatpush2.msra.mxu0 0.0
    %717 = vmatprep.subr.mxu0 0.0
    %718 = vmatpush2.msra.mxu0 0.0
    %719 = vmatprep.subr.mxu0 0.0
    %720 = vmatpush2.msra.mxu0 0.0
    %721 = vmatprep.subr.mxu0 0.0
    %722 = vmatpush2.msra.mxu0 0.0
    %723 = vmatprep.subr.mxu0 0.0
    %724 = vmatpush2.msra.mxu0 0.0
    %725 = vmatprep.subr.mxu0 0.0
    %726 = vmatpush2.msra.mxu0 0.0
    %727 = vmatprep.subr.mxu0 0.0
    %728 = vmatpush2.msra.mxu0 0.0
    %729 = vmatprep.subr.mxu0 0.0
    %730 = vmatpush2.msra.mxu0 0.0
    %731 = vmatprep.subr.mxu0 0.0
    %732 = vmatpush2.msra.mxu0 0.0
    %733 = vmatprep.subr.mxu0 0.0
    %734 = vmatpush2.msra.mxu0 0.0
    %735 = vmatprep.subr.mxu0 0.0
    %736 = vmatpush2.msra.mxu0 0.0
    %737 = vmatprep.subr.mxu0 0.0
    %738 = vmatpush2.msra.mxu0 0.0
    %739 = vmatprep.subr.mxu0 0.0
    %740 = vmatpush2.msra.mxu0 0.0
    %741 = vmatprep.subr.mxu0 0.0
    %742 = vmatpush2.msra.mxu0 0.0
    %743 = vmatprep.mubr.f32.mxu0 0.0
    %744 = vmatmul.mubr.f32.gmra.mxu0 %v603
    %v745 = vpop.f32.mrf.mxu0
    %v746 = vadd.f32 0.0, %v745
    %v747 = vpop.f32.mrf.mxu0
    %748 = vdwg.mxu0
    %v749 = vadd.f32 %v605, %v675
    %v750 = vxor.u32 %v749, 2147483648
    %v751 = vmul.f32 %v750, 1.442695
    %v752 = vpow.pop %v751
    %v753 = vadd.f32 %v752, 1.0
    %v754 = vrcp.pop %v753
    %v755 = vmul.f32 1.0, %v754
    %v756 = vadd.f32 %v606, %v677
    %v757 = vxor.u32 %v756, 2147483648
    %v758 = vmul.f32 %v757, 1.442695
    %v759 = vpow.pop %v758
    %v760 = vadd.f32 %v759, 1.0
    %v761 = vrcp.pop %v760
    %v762 = vmul.f32 1.0, %v761
    %v763 = vadd.f32 %v746, %v101
    %v764 = vmul.f32 %v755, %v763
    %v765 = vadd.f32 %v607, %v764
    %v766 = vtanh.pop %v765
    %v767 = vsub.f32 1.0, %v762
    %v768 = vmul.f32 %v767, %v766
    %v769 = vmul.f32 %v762, %v603
    %v770 = vadd.f32 %v768, %v769
    %s771 = scalar_lea.vmem [#allocation3], 96
    %v772 = vld [vmem:[%s771] sm:$0xff]
    %v773 = vld [vmem:[%s771 + $0x8] sm:$0xff]
    %v774 = vld [vmem:[%s771 + $0x10] sm:$0xff]
    %775 = vmatprep.subr.mxu0 %v94
    %776 = vmatpush1.msra.mxu0 %v93
    %777 = vmatprep.subr.mxu0 %v91
    %778 = vmatpush1.msra.mxu0 %v90
    %779 = vmatprep.subr.mxu0 %v88
    %780 = vmatpush1.msra.mxu0 %v87
    %781 = vmatprep.subr.mxu0 %v85
    %782 = vmatpush1.msra.mxu0 %v84
    %783 = vmatprep.subr.mxu0 %v82
    %784 = vmatpush1.msra.mxu0 %v81
    %785 = vmatprep.subr.mxu0 %v79
    %786 = vmatpush1.msra.mxu0 %v78
    %787 = vmatprep.subr.mxu0 %v76
    %788 = vmatpush1.msra.mxu0 %v75
    %789 = vmatprep.subr.mxu0 %v73
    %790 = vmatpush1.msra.mxu0 %v72
    %791 = vmatprep.subr.mxu0 %v70
    %792 = vmatpush1.msra.mxu0 %v69
    %793 = vmatprep.subr.mxu0 %v67
    %794 = vmatpush1.msra.mxu0 %v66
    %795 = vmatprep.subr.mxu0 %v64
    %796 = vmatpush1.msra.mxu0 %v63
    %797 = vmatprep.subr.mxu0 %v61
    %798 = vmatpush1.msra.mxu0 %v60
    %799 = vmatprep.subr.mxu0 %v58
    %800 = vmatpush1.msra.mxu0 %v57
    %801 = vmatprep.subr.mxu0 %v55
    %802 = vmatpush1.msra.mxu0 %v54
    %803 = vmatprep.subr.mxu0 %v52
    %804 = vmatpush1.msra.mxu0 %v51
    %805 = vmatprep.subr.mxu0 %v49
    %806 = vmatpush1.msra.mxu0 %v48
    %807 = vmatprep.subr.mxu0 0.0
    %808 = vmatpush2.msra.mxu0 0.0
    %809 = vmatprep.subr.mxu0 0.0
    %810 = vmatpush2.msra.mxu0 0.0
    %811 = vmatprep.subr.mxu0 0.0
    %812 = vmatpush2.msra.mxu0 0.0
    %813 = vmatprep.subr.mxu0 0.0
    %814 = vmatpush2.msra.mxu0 0.0
    %815 = vmatprep.subr.mxu0 0.0
    %816 = vmatpush2.msra.mxu0 0.0
    %817 = vmatprep.subr.mxu0 0.0
    %818 = vmatpush2.msra.mxu0 0.0
    %819 = vmatprep.subr.mxu0 0.0
    %820 = vmatpush2.msra.mxu0 0.0
    %821 = vmatprep.subr.mxu0 0.0
    %822 = vmatpush2.msra.mxu0 0.0
    %823 = vmatprep.subr.mxu0 0.0
    %824 = vmatpush2.msra.mxu0 0.0
    %825 = vmatprep.subr.mxu0 0.0
    %826 = vmatpush2.msra.mxu0 0.0
    %827 = vmatprep.subr.mxu0 0.0
    %828 = vmatpush2.msra.mxu0 0.0
    %829 = vmatprep.subr.mxu0 0.0
    %830 = vmatpush2.msra.mxu0 0.0
    %831 = vmatprep.subr.mxu0 0.0
    %832 = vmatpush2.msra.mxu0 0.0
    %833 = vmatprep.subr.mxu0 0.0
    %834 = vmatpush2.msra.mxu0 0.0
    %835 = vmatprep.subr.mxu0 0.0
    %836 = vmatpush2.msra.mxu0 0.0
    %837 = vmatprep.subr.mxu0 0.0
    %838 = vmatpush2.msra.mxu0 0.0
    %839 = vmatprep.mubr.f32.mxu0 0.0
    %840 = vmatmul.mubr.f32.gmra.mxu0 %v770
    %v841 = vpop.f32.mrf.mxu0
    %v842 = vadd.f32 0.0, %v841
    %v843 = vpop.f32.mrf.mxu0
    %v844 = vadd.f32 0.0, %v843
    %845 = vdwg.mxu0
    %846 = vmatprep.subr.mxu0 0.0
    %847 = vmatpush1.msra.mxu0 %v95
    %848 = vmatprep.subr.mxu0 0.0
    %849 = vmatpush1.msra.mxu0 %v92
    %850 = vmatprep.subr.mxu0 0.0
    %851 = vmatpush1.msra.mxu0 %v89
    %852 = vmatprep.subr.mxu0 0.0
    %853 = vmatpush1.msra.mxu0 %v86
    %854 = vmatprep.subr.mxu0 0.0
    %855 = vmatpush1.msra.mxu0 %v83
    %856 = vmatprep.subr.mxu0 0.0
    %857 = vmatpush1.msra.mxu0 %v80
    %858 = vmatprep.subr.mxu0 0.0
    %859 = vmatpush1.msra.mxu0 %v77
    %860 = vmatprep.subr.mxu0 0.0
    %861 = vmatpush1.msra.mxu0 %v74
    %862 = vmatprep.subr.mxu0 0.0
    %863 = vmatpush1.msra.mxu0 %v71
    %864 = vmatprep.subr.mxu0 0.0
    %865 = vmatpush1.msra.mxu0 %v68
    %866 = vmatprep.subr.mxu0 0.0
    %867 = vmatpush1.msra.mxu0 %v65
    %868 = vmatprep.subr.mxu0 0.0
    %869 = vmatpush1.msra.mxu0 %v62
    %870 = vmatprep.subr.mxu0 0.0
    %871 = vmatpush1.msra.mxu0 %v59
    %872 = vmatprep.subr.mxu0 0.0
    %873 = vmatpush1.msra.mxu0 %v56
    %874 = vmatprep.subr.mxu0 0.0
    %875 = vmatpush1.msra.mxu0 %v53
    %876 = vmatprep.subr.mxu0 0.0
    %877 = vmatpush1.msra.mxu0 %v50
    %878 = vmatprep.subr.mxu0 0.0
    %879 = vmatpush2.msra.mxu0 0.0
    %880 = vmatprep.subr.mxu0 0.0
    %881 = vmatpush2.msra.mxu0 0.0
    %882 = vmatprep.subr.mxu0 0.0
    %883 = vmatpush2.msra.mxu0 0.0
    %884 = vmatprep.subr.mxu0 0.0
    %885 = vmatpush2.msra.mxu0 0.0
    %886 = vmatprep.subr.mxu0 0.0
    %887 = vmatpush2.msra.mxu0 0.0
    %888 = vmatprep.subr.mxu0 0.0
    %889 = vmatpush2.msra.mxu0 0.0
    %890 = vmatprep.subr.mxu0 0.0
    %891 = vmatpush2.msra.mxu0 0.0
    %892 = vmatprep.subr.mxu0 0.0
    %893 = vmatpush2.msra.mxu0 0.0
    %894 = vmatprep.subr.mxu0 0.0
    %895 = vmatpush2.msra.mxu0 0.0
    %896 = vmatprep.subr.mxu0 0.0
    %897 = vmatpush2.msra.mxu0 0.0
    %898 = vmatprep.subr.mxu0 0.0
    %899 = vmatpush2.msra.mxu0 0.0
    %900 = vmatprep.subr.mxu0 0.0
    %901 = vmatpush2.msra.mxu0 0.0
    %902 = vmatprep.subr.mxu0 0.0
    %903 = vmatpush2.msra.mxu0 0.0
    %904 = vmatprep.subr.mxu0 0.0
    %905 = vmatpush2.msra.mxu0 0.0
    %906 = vmatprep.subr.mxu0 0.0
    %907 = vmatpush2.msra.mxu0 0.0
    %908 = vmatprep.subr.mxu0 0.0
    %909 = vmatpush2.msra.mxu0 0.0
    %910 = vmatprep.mubr.f32.mxu0 0.0
    %911 = vmatmul.mubr.f32.gmra.mxu0 %v770
    %v912 = vpop.f32.mrf.mxu0
    %v913 = vadd.f32 0.0, %v912
    %v914 = vpop.f32.mrf.mxu0
    %915 = vdwg.mxu0
    %v916 = vadd.f32 %v772, %v842
    %v917 = vxor.u32 %v916, 2147483648
    %v918 = vmul.f32 %v917, 1.442695
    %v919 = vpow.pop %v918
    %v920 = vadd.f32 %v919, 1.0
    %v921 = vrcp.pop %v920
    %v922 = vmul.f32 1.0, %v921
    %v923 = vadd.f32 %v773, %v844
    %v924 = vxor.u32 %v923, 2147483648
    %v925 = vmul.f32 %v924, 1.442695
    %v926 = vpow.pop %v925
    %v927 = vadd.f32 %v926, 1.0
    %v928 = vrcp.pop %v927
    %v929 = vmul.f32 1.0, %v928
    %v930 = vadd.f32 %v913, %v101
    %v931 = vmul.f32 %v922, %v930
    %v932 = vadd.f32 %v774, %v931
    %v933 = vtanh.pop %v932
    %v934 = vsub.f32 1.0, %v929
    %v935 = vmul.f32 %v934, %v933
    %v936 = vmul.f32 %v929, %v770
    %v937 = vadd.f32 %v935, %v936
    %s938 = scalar_lea.vmem [#allocation3], 120
    %v939 = vld [vmem:[%s938] sm:$0xff]
    %v940 = vld [vmem:[%s938 + $0x8] sm:$0xff]
    %v941 = vld [vmem:[%s938 + $0x10] sm:$0xff]
    %942 = vmatprep.subr.mxu0 %v94
    %943 = vmatpush1.msra.mxu0 %v93
    %944 = vmatprep.subr.mxu0 %v91
    %945 = vmatpush1.msra.mxu0 %v90
    %946 = vmatprep.subr.mxu0 %v88
    %947 = vmatpush1.msra.mxu0 %v87
    %948 = vmatprep.subr.mxu0 %v85
    %949 = vmatpush1.msra.mxu0 %v84
    %950 = vmatprep.subr.mxu0 %v82
    %951 = vmatpush1.msra.mxu0 %v81
    %952 = vmatprep.subr.mxu0 %v79
    %953 = vmatpush1.msra.mxu0 %v78
    %954 = vmatprep.subr.mxu0 %v76
    %955 = vmatpush1.msra.mxu0 %v75
    %956 = vmatprep.subr.mxu0 %v73
    %957 = vmatpush1.msra.mxu0 %v72
    %958 = vmatprep.subr.mxu0 %v70
    %959 = vmatpush1.msra.mxu0 %v69
    %960 = vmatprep.subr.mxu0 %v67
    %961 = vmatpush1.msra.mxu0 %v66
    %962 = vmatprep.subr.mxu0 %v64
    %963 = vmatpush1.msra.mxu0 %v63
    %964 = vmatprep.subr.mxu0 %v61
    %965 = vmatpush1.msra.mxu0 %v60
    %966 = vmatprep.subr.mxu0 %v58
    %967 = vmatpush1.msra.mxu0 %v57
    %968 = vmatprep.subr.mxu0 %v55
    %969 = vmatpush1.msra.mxu0 %v54
    %970 = vmatprep.subr.mxu0 %v52
    %971 = vmatpush1.msra.mxu0 %v51
    %972 = vmatprep.subr.mxu0 %v49
    %973 = vmatpush1.msra.mxu0 %v48
    %974 = vmatprep.subr.mxu0 0.0
    %975 = vmatpush2.msra.mxu0 0.0
    %976 = vmatprep.subr.mxu0 0.0
    %977 = vmatpush2.msra.mxu0 0.0
    %978 = vmatprep.subr.mxu0 0.0
    %979 = vmatpush2.msra.mxu0 0.0
    %980 = vmatprep.subr.mxu0 0.0
    %981 = vmatpush2.msra.mxu0 0.0
    %982 = vmatprep.subr.mxu0 0.0
    %983 = vmatpush2.msra.mxu0 0.0
    %984 = vmatprep.subr.mxu0 0.0
    %985 = vmatpush2.msra.mxu0 0.0
    %986 = vmatprep.subr.mxu0 0.0
    %987 = vmatpush2.msra.mxu0 0.0
    %988 = vmatprep.subr.mxu0 0.0
    %989 = vmatpush2.msra.mxu0 0.0
    %990 = vmatprep.subr.mxu0 0.0
    %991 = vmatpush2.msra.mxu0 0.0
    %992 = vmatprep.subr.mxu0 0.0
    %993 = vmatpush2.msra.mxu0 0.0
    %994 = vmatprep.subr.mxu0 0.0
    %995 = vmatpush2.msra.mxu0 0.0
    %996 = vmatprep.subr.mxu0 0.0
    %997 = vmatpush2.msra.mxu0 0.0
    %998 = vmatprep.subr.mxu0 0.0
    %999 = vmatpush2.msra.mxu0 0.0
    %1000 = vmatprep.subr.mxu0 0.0
    %1001 = vmatpush2.msra.mxu0 0.0
    %1002 = vmatprep.subr.mxu0 0.0
    %1003 = vmatpush2.msra.mxu0 0.0
    %1004 = vmatprep.subr.mxu0 0.0
    %1005 = vmatpush2.msra.mxu0 0.0
    %1006 = vmatprep.mubr.f32.mxu0 0.0
    %1007 = vmatmul.mubr.f32.gmra.mxu0 %v937
    %v1008 = vpop.f32.mrf.mxu0
    %v1009 = vadd.f32 0.0, %v1008
    %v1010 = vpop.f32.mrf.mxu0
    %v1011 = vadd.f32 0.0, %v1010
    %1012 = vdwg.mxu0
    %1013 = vmatprep.subr.mxu0 0.0
    %1014 = vmatpush1.msra.mxu0 %v95
    %1015 = vmatprep.subr.mxu0 0.0
    %1016 = vmatpush1.msra.mxu0 %v92
    %1017 = vmatprep.subr.mxu0 0.0
    %1018 = vmatpush1.msra.mxu0 %v89
    %1019 = vmatprep.subr.mxu0 0.0
    %1020 = vmatpush1.msra.mxu0 %v86
    %1021 = vmatprep.subr.mxu0 0.0
    %1022 = vmatpush1.msra.mxu0 %v83
    %1023 = vmatprep.subr.mxu0 0.0
    %1024 = vmatpush1.msra.mxu0 %v80
    %1025 = vmatprep.subr.mxu0 0.0
    %1026 = vmatpush1.msra.mxu0 %v77
    %1027 = vmatprep.subr.mxu0 0.0
    %1028 = vmatpush1.msra.mxu0 %v74
    %1029 = vmatprep.subr.mxu0 0.0
    %1030 = vmatpush1.msra.mxu0 %v71
    %1031 = vmatprep.subr.mxu0 0.0
    %1032 = vmatpush1.msra.mxu0 %v68
    %1033 = vmatprep.subr.mxu0 0.0
    %1034 = vmatpush1.msra.mxu0 %v65
    %1035 = vmatprep.subr.mxu0 0.0
    %1036 = vmatpush1.msra.mxu0 %v62
    %1037 = vmatprep.subr.mxu0 0.0
    %1038 = vmatpush1.msra.mxu0 %v59
    %1039 = vmatprep.subr.mxu0 0.0
    %1040 = vmatpush1.msra.mxu0 %v56
    %1041 = vmatprep.subr.mxu0 0.0
    %1042 = vmatpush1.msra.mxu0 %v53
    %1043 = vmatprep.subr.mxu0 0.0
    %1044 = vmatpush1.msra.mxu0 %v50
    %1045 = vmatprep.subr.mxu0 0.0
    %1046 = vmatpush2.msra.mxu0 0.0
    %1047 = vmatprep.subr.mxu0 0.0
    %1048 = vmatpush2.msra.mxu0 0.0
    %1049 = vmatprep.subr.mxu0 0.0
    %1050 = vmatpush2.msra.mxu0 0.0
    %1051 = vmatprep.subr.mxu0 0.0
    %1052 = vmatpush2.msra.mxu0 0.0
    %1053 = vmatprep.subr.mxu0 0.0
    %1054 = vmatpush2.msra.mxu0 0.0
    %1055 = vmatprep.subr.mxu0 0.0
    %1056 = vmatpush2.msra.mxu0 0.0
    %1057 = vmatprep.subr.mxu0 0.0
    %1058 = vmatpush2.msra.mxu0 0.0
    %1059 = vmatprep.subr.mxu0 0.0
    %1060 = vmatpush2.msra.mxu0 0.0
    %1061 = vmatprep.subr.mxu0 0.0
    %1062 = vmatpush2.msra.mxu0 0.0
    %1063 = vmatprep.subr.mxu0 0.0
    %1064 = vmatpush2.msra.mxu0 0.0
    %1065 = vmatprep.subr.mxu0 0.0
    %1066 = vmatpush2.msra.mxu0 0.0
    %1067 = vmatprep.subr.mxu0 0.0
    %1068 = vmatpush2.msra.mxu0 0.0
    %1069 = vmatprep.subr.mxu0 0.0
    %1070 = vmatpush2.msra.mxu0 0.0
    %1071 = vmatprep.subr.mxu0 0.0
    %1072 = vmatpush2.msra.mxu0 0.0
    %1073 = vmatprep.subr.mxu0 0.0
    %1074 = vmatpush2.msra.mxu0 0.0
    %1075 = vmatprep.subr.mxu0 0.0
    %1076 = vmatpush2.msra.mxu0 0.0
    %1077 = vmatprep.mubr.f32.mxu0 0.0
    %1078 = vmatmul.mubr.f32.gmra.mxu0 %v937
    %v1079 = vpop.f32.mrf.mxu0
    %v1080 = vadd.f32 0.0, %v1079
    %v1081 = vpop.f32.mrf.mxu0
    %1082 = vdwg.mxu0
    %v1083 = vadd.f32 %v939, %v1009
    %v1084 = vxor.u32 %v1083, 2147483648
    %v1085 = vmul.f32 %v1084, 1.442695
    %v1086 = vpow.pop %v1085
    %v1087 = vadd.f32 %v1086, 1.0
    %v1088 = vrcp.pop %v1087
    %v1089 = vmul.f32 1.0, %v1088
    %v1090 = vadd.f32 %v940, %v1011
    %v1091 = vxor.u32 %v1090, 2147483648
    %v1092 = vmul.f32 %v1091, 1.442695
    %v1093 = vpow.pop %v1092
    %v1094 = vadd.f32 %v1093, 1.0
    %v1095 = vrcp.pop %v1094
    %v1096 = vmul.f32 1.0, %v1095
    %v1097 = vadd.f32 %v1080, %v101
    %v1098 = vmul.f32 %v1089, %v1097
    %v1099 = vadd.f32 %v941, %v1098
    %v1100 = vtanh.pop %v1099
    %v1101 = vsub.f32 1.0, %v1096
    %v1102 = vmul.f32 %v1101, %v1100
    %v1103 = vmul.f32 %v1096, %v937
    %v1104 = vadd.f32 %v1102, %v1103
    %s1105 = scalar_lea.vmem [#allocation3], 144
    %v1106 = vld [vmem:[%s1105] sm:$0xff]
    %v1107 = vld [vmem:[%s1105 + $0x8] sm:$0xff]
    %v1108 = vld [vmem:[%s1105 + $0x10] sm:$0xff]
    %1109 = vmatprep.subr.mxu0 %v94
    %1110 = vmatpush1.msra.mxu0 %v93
    %1111 = vmatprep.subr.mxu0 %v91
    %1112 = vmatpush1.msra.mxu0 %v90
    %1113 = vmatprep.subr.mxu0 %v88
    %1114 = vmatpush1.msra.mxu0 %v87
    %1115 = vmatprep.subr.mxu0 %v85
    %1116 = vmatpush1.msra.mxu0 %v84
    %1117 = vmatprep.subr.mxu0 %v82
    %1118 = vmatpush1.msra.mxu0 %v81
    %1119 = vmatprep.subr.mxu0 %v79
    %1120 = vmatpush1.msra.mxu0 %v78
    %1121 = vmatprep.subr.mxu0 %v76
    %1122 = vmatpush1.msra.mxu0 %v75
    %1123 = vmatprep.subr.mxu0 %v73
    %1124 = vmatpush1.msra.mxu0 %v72
    %1125 = vmatprep.subr.mxu0 %v70
    %1126 = vmatpush1.msra.mxu0 %v69
    %1127 = vmatprep.subr.mxu0 %v67
    %1128 = vmatpush1.msra.mxu0 %v66
    %1129 = vmatprep.subr.mxu0 %v64
    %1130 = vmatpush1.msra.mxu0 %v63
    %1131 = vmatprep.subr.mxu0 %v61
    %1132 = vmatpush1.msra.mxu0 %v60
    %1133 = vmatprep.subr.mxu0 %v58
    %1134 = vmatpush1.msra.mxu0 %v57
    %1135 = vmatprep.subr.mxu0 %v55
    %1136 = vmatpush1.msra.mxu0 %v54
    %1137 = vmatprep.subr.mxu0 %v52
    %1138 = vmatpush1.msra.mxu0 %v51
    %1139 = vmatprep.subr.mxu0 %v49
    %1140 = vmatpush1.msra.mxu0 %v48
    %1141 = vmatprep.subr.mxu0 0.0
    %1142 = vmatpush2.msra.mxu0 0.0
    %1143 = vmatprep.subr.mxu0 0.0
    %1144 = vmatpush2.msra.mxu0 0.0
    %1145 = vmatprep.subr.mxu0 0.0
    %1146 = vmatpush2.msra.mxu0 0.0
    %1147 = vmatprep.subr.mxu0 0.0
    %1148 = vmatpush2.msra.mxu0 0.0
    %1149 = vmatprep.subr.mxu0 0.0
    %1150 = vmatpush2.msra.mxu0 0.0
    %1151 = vmatprep.subr.mxu0 0.0
    %1152 = vmatpush2.msra.mxu0 0.0
    %1153 = vmatprep.subr.mxu0 0.0
    %1154 = vmatpush2.msra.mxu0 0.0
    %1155 = vmatprep.subr.mxu0 0.0
    %1156 = vmatpush2.msra.mxu0 0.0
    %1157 = vmatprep.subr.mxu0 0.0
    %1158 = vmatpush2.msra.mxu0 0.0
    %1159 = vmatprep.subr.mxu0 0.0
    %1160 = vmatpush2.msra.mxu0 0.0
    %1161 = vmatprep.subr.mxu0 0.0
    %1162 = vmatpush2.msra.mxu0 0.0
    %1163 = vmatprep.subr.mxu0 0.0
    %1164 = vmatpush2.msra.mxu0 0.0
    %1165 = vmatprep.subr.mxu0 0.0
    %1166 = vmatpush2.msra.mxu0 0.0
    %1167 = vmatprep.subr.mxu0 0.0
    %1168 = vmatpush2.msra.mxu0 0.0
    %1169 = vmatprep.subr.mxu0 0.0
    %1170 = vmatpush2.msra.mxu0 0.0
    %1171 = vmatprep.subr.mxu0 0.0
    %1172 = vmatpush2.msra.mxu0 0.0
    %1173 = vmatprep.mubr.f32.mxu0 0.0
    %1174 = vmatmul.mubr.f32.gmra.mxu0 %v1104
    %v1175 = vpop.f32.mrf.mxu0
    %v1176 = vadd.f32 0.0, %v1175
    %v1177 = vpop.f32.mrf.mxu0
    %v1178 = vadd.f32 0.0, %v1177
    %1179 = vdwg.mxu0
    %1180 = vmatprep.subr.mxu0 0.0
    %1181 = vmatpush1.msra.mxu0 %v95
    %1182 = vmatprep.subr.mxu0 0.0
    %1183 = vmatpush1.msra.mxu0 %v92
    %1184 = vmatprep.subr.mxu0 0.0
    %1185 = vmatpush1.msra.mxu0 %v89
    %1186 = vmatprep.subr.mxu0 0.0
    %1187 = vmatpush1.msra.mxu0 %v86
    %1188 = vmatprep.subr.mxu0 0.0
    %1189 = vmatpush1.msra.mxu0 %v83
    %1190 = vmatprep.subr.mxu0 0.0
    %1191 = vmatpush1.msra.mxu0 %v80
    %1192 = vmatprep.subr.mxu0 0.0
    %1193 = vmatpush1.msra.mxu0 %v77
    %1194 = vmatprep.subr.mxu0 0.0
    %1195 = vmatpush1.msra.mxu0 %v74
    %1196 = vmatprep.subr.mxu0 0.0
    %1197 = vmatpush1.msra.mxu0 %v71
    %1198 = vmatprep.subr.mxu0 0.0
    %1199 = vmatpush1.msra.mxu0 %v68
    %1200 = vmatprep.subr.mxu0 0.0
    %1201 = vmatpush1.msra.mxu0 %v65
    %1202 = vmatprep.subr.mxu0 0.0
    %1203 = vmatpush1.msra.mxu0 %v62
    %1204 = vmatprep.subr.mxu0 0.0
    %1205 = vmatpush1.msra.mxu0 %v59
    %1206 = vmatprep.subr.mxu0 0.0
    %1207 = vmatpush1.msra.mxu0 %v56
    %1208 = vmatprep.subr.mxu0 0.0
    %1209 = vmatpush1.msra.mxu0 %v53
    %1210 = vmatprep.subr.mxu0 0.0
    %1211 = vmatpush1.msra.mxu0 %v50
    %1212 = vmatprep.subr.mxu0 0.0
    %1213 = vmatpush2.msra.mxu0 0.0
    %1214 = vmatprep.subr.mxu0 0.0
    %1215 = vmatpush2.msra.mxu0 0.0
    %1216 = vmatprep.subr.mxu0 0.0
    %1217 = vmatpush2.msra.mxu0 0.0
    %1218 = vmatprep.subr.mxu0 0.0
    %1219 = vmatpush2.msra.mxu0 0.0
    %1220 = vmatprep.subr.mxu0 0.0
    %1221 = vmatpush2.msra.mxu0 0.0
    %1222 = vmatprep.subr.mxu0 0.0
    %1223 = vmatpush2.msra.mxu0 0.0
    %1224 = vmatprep.subr.mxu0 0.0
    %1225 = vmatpush2.msra.mxu0 0.0
    %1226 = vmatprep.subr.mxu0 0.0
    %1227 = vmatpush2.msra.mxu0 0.0
    %1228 = vmatprep.subr.mxu0 0.0
    %1229 = vmatpush2.msra.mxu0 0.0
    %1230 = vmatprep.subr.mxu0 0.0
    %1231 = vmatpush2.msra.mxu0 0.0
    %1232 = vmatprep.subr.mxu0 0.0
    %1233 = vmatpush2.msra.mxu0 0.0
    %1234 = vmatprep.subr.mxu0 0.0
    %1235 = vmatpush2.msra.mxu0 0.0
    %1236 = vmatprep.subr.mxu0 0.0
    %1237 = vmatpush2.msra.mxu0 0.0
    %1238 = vmatprep.subr.mxu0 0.0
    %1239 = vmatpush2.msra.mxu0 0.0
    %1240 = vmatprep.subr.mxu0 0.0
    %1241 = vmatpush2.msra.mxu0 0.0
    %1242 = vmatprep.subr.mxu0 0.0
    %1243 = vmatpush2.msra.mxu0 0.0
    %1244 = vmatprep.mubr.f32.mxu0 0.0
    %1245 = vmatmul.mubr.f32.gmra.mxu0 %v1104
    %v1246 = vpop.f32.mrf.mxu0
    %v1247 = vadd.f32 0.0, %v1246
    %v1248 = vpop.f32.mrf.mxu0
    %1249 = vdwg.mxu0
    %v1250 = vadd.f32 %v1106, %v1176
    %v1251 = vxor.u32 %v1250, 2147483648
    %v1252 = vmul.f32 %v1251, 1.442695
    %v1253 = vpow.pop %v1252
    %v1254 = vadd.f32 %v1253, 1.0
    %v1255 = vrcp.pop %v1254
    %v1256 = vmul.f32 1.0, %v1255
    %v1257 = vadd.f32 %v1107, %v1178
    %v1258 = vxor.u32 %v1257, 2147483648
    %v1259 = vmul.f32 %v1258, 1.442695
    %v1260 = vpow.pop %v1259
    %v1261 = vadd.f32 %v1260, 1.0
    %v1262 = vrcp.pop %v1261
    %v1263 = vmul.f32 1.0, %v1262
    %v1264 = vadd.f32 %v1247, %v101
    %v1265 = vmul.f32 %v1256, %v1264
    %v1266 = vadd.f32 %v1108, %v1265
    %v1267 = vtanh.pop %v1266
    %v1268 = vsub.f32 1.0, %v1263
    %v1269 = vmul.f32 %v1268, %v1267
    %v1270 = vmul.f32 %v1263, %v1104
    %v1271 = vadd.f32 %v1269, %v1270
    %s1272 = scalar_lea.vmem [#allocation3], 168
    %v1273 = vld [vmem:[%s1272] sm:$0xff]
    %v1274 = vld [vmem:[%s1272 + $0x8] sm:$0xff]
    %v1275 = vld [vmem:[%s1272 + $0x10] sm:$0xff]
    %1276 = vmatprep.subr.mxu0 %v94
    %1277 = vmatpush1.msra.mxu0 %v93
    %1278 = vmatprep.subr.mxu0 %v91
    %1279 = vmatpush1.msra.mxu0 %v90
    %1280 = vmatprep.subr.mxu0 %v88
    %1281 = vmatpush1.msra.mxu0 %v87
    %1282 = vmatprep.subr.mxu0 %v85
    %1283 = vmatpush1.msra.mxu0 %v84
    %1284 = vmatprep.subr.mxu0 %v82
    %1285 = vmatpush1.msra.mxu0 %v81
    %1286 = vmatprep.subr.mxu0 %v79
    %1287 = vmatpush1.msra.mxu0 %v78
    %1288 = vmatprep.subr.mxu0 %v76
    %1289 = vmatpush1.msra.mxu0 %v75
    %1290 = vmatprep.subr.mxu0 %v73
    %1291 = vmatpush1.msra.mxu0 %v72
    %1292 = vmatprep.subr.mxu0 %v70
    %1293 = vmatpush1.msra.mxu0 %v69
    %1294 = vmatprep.subr.mxu0 %v67
    %1295 = vmatpush1.msra.mxu0 %v66
    %1296 = vmatprep.subr.mxu0 %v64
    %1297 = vmatpush1.msra.mxu0 %v63
    %1298 = vmatprep.subr.mxu0 %v61
    %1299 = vmatpush1.msra.mxu0 %v60
    %1300 = vmatprep.subr.mxu0 %v58
    %1301 = vmatpush1.msra.mxu0 %v57
    %1302 = vmatprep.subr.mxu0 %v55
    %1303 = vmatpush1.msra.mxu0 %v54
    %1304 = vmatprep.subr.mxu0 %v52
    %1305 = vmatpush1.msra.mxu0 %v51
    %1306 = vmatprep.subr.mxu0 %v49
    %1307 = vmatpush1.msra.mxu0 %v48
    %1308 = vmatprep.subr.mxu0 0.0
    %1309 = vmatpush2.msra.mxu0 0.0
    %1310 = vmatprep.subr.mxu0 0.0
    %1311 = vmatpush2.msra.mxu0 0.0
    %1312 = vmatprep.subr.mxu0 0.0
    %1313 = vmatpush2.msra.mxu0 0.0
    %1314 = vmatprep.subr.mxu0 0.0
    %1315 = vmatpush2.msra.mxu0 0.0
    %1316 = vmatprep.subr.mxu0 0.0
    %1317 = vmatpush2.msra.mxu0 0.0
    %1318 = vmatprep.subr.mxu0 0.0
    %1319 = vmatpush2.msra.mxu0 0.0
    %1320 = vmatprep.subr.mxu0 0.0
    %1321 = vmatpush2.msra.mxu0 0.0
    %1322 = vmatprep.subr.mxu0 0.0
    %1323 = vmatpush2.msra.mxu0 0.0
    %1324 = vmatprep.subr.mxu0 0.0
    %1325 = vmatpush2.msra.mxu0 0.0
    %1326 = vmatprep.subr.mxu0 0.0
    %1327 = vmatpush2.msra.mxu0 0.0
    %1328 = vmatprep.subr.mxu0 0.0
    %1329 = vmatpush2.msra.mxu0 0.0
    %1330 = vmatprep.subr.mxu0 0.0
    %1331 = vmatpush2.msra.mxu0 0.0
    %1332 = vmatprep.subr.mxu0 0.0
    %1333 = vmatpush2.msra.mxu0 0.0
    %1334 = vmatprep.subr.mxu0 0.0
    %1335 = vmatpush2.msra.mxu0 0.0
    %1336 = vmatprep.subr.mxu0 0.0
    %1337 = vmatpush2.msra.mxu0 0.0
    %1338 = vmatprep.subr.mxu0 0.0
    %1339 = vmatpush2.msra.mxu0 0.0
    %1340 = vmatprep.mubr.f32.mxu0 0.0
    %1341 = vmatmul.mubr.f32.gmra.mxu0 %v1271
    %v1342 = vpop.f32.mrf.mxu0
    %v1343 = vadd.f32 0.0, %v1342
    %v1344 = vpop.f32.mrf.mxu0
    %v1345 = vadd.f32 0.0, %v1344
    %1346 = vdwg.mxu0
    %1347 = vmatprep.subr.mxu0 0.0
    %1348 = vmatpush1.msra.mxu0 %v95
    %1349 = vmatprep.subr.mxu0 0.0
    %1350 = vmatpush1.msra.mxu0 %v92
    %1351 = vmatprep.subr.mxu0 0.0
    %1352 = vmatpush1.msra.mxu0 %v89
    %1353 = vmatprep.subr.mxu0 0.0
    %1354 = vmatpush1.msra.mxu0 %v86
    %1355 = vmatprep.subr.mxu0 0.0
    %1356 = vmatpush1.msra.mxu0 %v83
    %1357 = vmatprep.subr.mxu0 0.0
    %1358 = vmatpush1.msra.mxu0 %v80
    %1359 = vmatprep.subr.mxu0 0.0
    %1360 = vmatpush1.msra.mxu0 %v77
    %1361 = vmatprep.subr.mxu0 0.0
    %1362 = vmatpush1.msra.mxu0 %v74
    %1363 = vmatprep.subr.mxu0 0.0
    %1364 = vmatpush1.msra.mxu0 %v71
    %1365 = vmatprep.subr.mxu0 0.0
    %1366 = vmatpush1.msra.mxu0 %v68
    %1367 = vmatprep.subr.mxu0 0.0
    %1368 = vmatpush1.msra.mxu0 %v65
    %1369 = vmatprep.subr.mxu0 0.0
    %1370 = vmatpush1.msra.mxu0 %v62
    %1371 = vmatprep.subr.mxu0 0.0
    %1372 = vmatpush1.msra.mxu0 %v59
    %1373 = vmatprep.subr.mxu0 0.0
    %1374 = vmatpush1.msra.mxu0 %v56
    %1375 = vmatprep.subr.mxu0 0.0
    %1376 = vmatpush1.msra.mxu0 %v53
    %1377 = vmatprep.subr.mxu0 0.0
    %1378 = vmatpush1.msra.mxu0 %v50
    %1379 = vmatprep.subr.mxu0 0.0
    %1380 = vmatpush2.msra.mxu0 0.0
    %1381 = vmatprep.subr.mxu0 0.0
    %1382 = vmatpush2.msra.mxu0 0.0
    %1383 = vmatprep.subr.mxu0 0.0
    %1384 = vmatpush2.msra.mxu0 0.0
    %1385 = vmatprep.subr.mxu0 0.0
    %1386 = vmatpush2.msra.mxu0 0.0
    %1387 = vmatprep.subr.mxu0 0.0
    %1388 = vmatpush2.msra.mxu0 0.0
    %1389 = vmatprep.subr.mxu0 0.0
    %1390 = vmatpush2.msra.mxu0 0.0
    %1391 = vmatprep.subr.mxu0 0.0
    %1392 = vmatpush2.msra.mxu0 0.0
    %1393 = vmatprep.subr.mxu0 0.0
    %1394 = vmatpush2.msra.mxu0 0.0
    %1395 = vmatprep.subr.mxu0 0.0
    %1396 = vmatpush2.msra.mxu0 0.0
    %1397 = vmatprep.subr.mxu0 0.0
    %1398 = vmatpush2.msra.mxu0 0.0
    %1399 = vmatprep.subr.mxu0 0.0
    %1400 = vmatpush2.msra.mxu0 0.0
    %1401 = vmatprep.subr.mxu0 0.0
    %1402 = vmatpush2.msra.mxu0 0.0
    %1403 = vmatprep.subr.mxu0 0.0
    %1404 = vmatpush2.msra.mxu0 0.0
    %1405 = vmatprep.subr.mxu0 0.0
    %1406 = vmatpush2.msra.mxu0 0.0
    %1407 = vmatprep.subr.mxu0 0.0
    %1408 = vmatpush2.msra.mxu0 0.0
    %1409 = vmatprep.subr.mxu0 0.0
    %1410 = vmatpush2.msra.mxu0 0.0
    %1411 = vmatprep.mubr.f32.mxu0 0.0
    %1412 = vmatmul.mubr.f32.gmra.mxu0 %v1271
    %v1413 = vpop.f32.mrf.mxu0
    %v1414 = vadd.f32 0.0, %v1413
    %v1415 = vpop.f32.mrf.mxu0
    %1416 = vdwg.mxu0
    %v1417 = vadd.f32 %v1273, %v1343
    %v1418 = vxor.u32 %v1417, 2147483648
    %v1419 = vmul.f32 %v1418, 1.442695
    %v1420 = vpow.pop %v1419
    %v1421 = vadd.f32 %v1420, 1.0
    %v1422 = vrcp.pop %v1421
    %v1423 = vmul.f32 1.0, %v1422
    %v1424 = vadd.f32 %v1274, %v1345
    %v1425 = vxor.u32 %v1424, 2147483648
    %v1426 = vmul.f32 %v1425, 1.442695
    %v1427 = vpow.pop %v1426
    %v1428 = vadd.f32 %v1427, 1.0
    %v1429 = vrcp.pop %v1428
    %v1430 = vmul.f32 1.0, %v1429
    %v1431 = vadd.f32 %v1414, %v101
    %v1432 = vmul.f32 %v1423, %v1431
    %v1433 = vadd.f32 %v1275, %v1432
    %v1434 = vtanh.pop %v1433
    %v1435 = vsub.f32 1.0, %v1430
    %v1436 = vmul.f32 %v1435, %v1434
    %v1437 = vmul.f32 %v1430, %v1271
    %v1438 = vadd.f32 %v1436, %v1437
    %1439 = vst [vmem:[#allocation2] sm:$0xff] %v1438
    // Predicated region
    $region26: #{tpu_custom_call.1} parent=1 // pred_check
      %p1440 = pneg %p43
    $region27: #{tpu_custom_call.1} parent=1 // pred_check_branch
      %1442 = sbr.rel (%p1440) target = $region29
    $region28: #{tpu_custom_call.1} parent=1 // pred_region
      %1443 = vst [vmem:[#allocation8] sm:$0xff] %v1438
    $region29: #{tpu_custom_call.1} parent=1 // pred_fallthru
      _
    // Predicated region
    $region30: #{tpu_custom_call.1} parent=1 // pred_check
      _
    $region31: #{tpu_custom_call.1} parent=1 // pred_check_branch
      %1445 = sbr.rel (0) target = $region33
    $region32: #{tpu_custom_call.1} parent=1 // pred_region
      %s1447 = ssub.s32 128, 128
      %1448 = vsyncadd [#allocation5], %s1447
      %s1450 = sshll.u32 [#allocation8], 4
      %s1451 = int_to_ptr.vmem [resolvable:$true] %s1450
      %1453 = dma.vmem_to_hbm [thread:$0]  %s1451, 128, %s3, [#allocation5]
    $region33: #{tpu_custom_call.1} parent=1 // pred_fallthru
      _
    // Predicated region
    $region34: #{tpu_custom_call.1} parent=1 // pred_check
      _
    $region35: #{tpu_custom_call.1} parent=1 // pred_check_branch
      %1455 = sbr.rel (0) target = $region37
    $region36: #{tpu_custom_call.1} parent=1 // pred_region
      %1456 = dma.done [#allocation5], 128
    $region37: #{tpu_custom_call.1} parent=1 // pred_fallthru
      _
    %1457 = vsyncpa [#allocation4], 1
    %1458 = vsyncpa [#allocation7], 1
    %1459 = vsyncpa [#allocation5], 1

</llo_original>
